<compile_context>
chip_gen: v7x
topology: tpu7x:2x2x1
jax: 0.10.0
libtpu: 0.0.40
codegen_flags: <defaults>
</compile_context>

<pallas_src>
import functools

import jax
import jax.numpy as jnp
from jax.experimental import pallas as pl
from jax.experimental.pallas import tpu as pltpu


# ---------------------------------------------------------------------------
# helpers
# ---------------------------------------------------------------------------
def _pick_tile(L, target=2048):
    """L-tile size: ~target, evenly splitting L, rounded up to a multiple of 8."""
    if L <= target:
        return L
    nt = -(-L // target)          # cdiv
    tl = -(-L // nt)              # even split
    return -(-tl // 8) * 8        # multiple of 8 (never larger than target+7)


# ---------------------------------------------------------------------------
# Fused kernel: conv stack + pool + DNN + attention + classifier + log_softmax.
# Grid = (B, nt).  x_ref: (1, 1, TL+4, 6) bf16 tile window of the tap-folded input
# (rows = positions s-2 .. s+TL+1).  pool_ref: (1, 256) f32 scratch accumulator.
# Output: (1, 1, 10) log-probs, written only at the last L-tile of each batch row.
# ---------------------------------------------------------------------------
def _hkdd_fused_kernel(x_ref, w1_ref, b1_ref, w2_ref, b2_ref, w3_ref, b3_ref,
                       hand_ref, dw1_ref, db1_ref, dw2_ref, db2_ref, dw3_ref, db3_ref,
                       wa1c_ref, wa1d_ref, ba1_ref, wa2_ref, ba2_ref,
                       wcc_ref, wcd_ref, bc_ref,
                       o_ref, pool_ref, *, L, TL):
    f32, bf16 = jnp.float32, jnp.bfloat16
    t = pl.program_id(1)
    nt = pl.num_programs(1)
    s = t * TL

    # Only the first tile (pos < 0) and the last two tiles (pos >= L possible in the
    # bottom halo) ever need zero-pad masking; interior tiles skip it at runtime.
    edge = jnp.logical_or(t == 0, t >= nt - 2)

    def mask_oob(h, first_pos, gate):
        def do(v):
            p = first_pos + jax.lax.broadcasted_iota(jnp.int32, (v.shape[0], 1), 0)
            return jnp.where(jnp.logical_and(p >= 0, p < L), v, 0.0)
        return jax.lax.cond(gate, do, lambda v: v, h)

    x = x_ref[0, 0]                                                      # (TL+4, 6) bf16

    # ---- conv1: taps pre-folded host-side -> one K=6 bf16 MXU matmul ----
    h1 = jnp.dot(x, w1_ref[...], preferred_element_type=f32) + b1_ref[...]
    h1 = jnp.maximum(h1, 0.0).astype(bf16)                               # (TL+4, 64) bf16
    h1 = mask_oob(h1, s - 2, edge)

    # ---- conv2: fold 3 taps into one K=192 bf16 MXU matmul (LHS built in bf16) ----
    x2 = jnp.concatenate([h1[0:TL + 2], h1[1:TL + 3], h1[2:TL + 4]], axis=1)
    h2 = jnp.dot(x2, w2_ref[...], preferred_element_type=f32) + b2_ref[...]
    h2 = jnp.maximum(h2, 0.0).astype(bf16)                               # (TL+2, 128) bf16
    h2 = mask_oob(h2, s - 1, edge)

    # ---- conv3: fold 3 taps into one K=384 bf16 MXU matmul ----
    x3 = jnp.concatenate([h2[0:TL], h2[1:TL + 1], h2[2:TL + 2]], axis=1)
    h3 = jnp.dot(x3, w3_ref[...], preferred_element_type=f32) + b3_ref[...]
    h3 = jnp.maximum(h3, 0.0)                                            # (TL, 256) f32
    if L % TL != 0:  # ragged tail rows exist only when L is not a multiple of TL
        h3 = mask_oob(h3, s, t == nt - 1)

    # ---- fused AdaptiveAvgPool1d(1): accumulate row sums in a resident scratch ----
    @pl.when(t == 0)
    def _():
        pool_ref[...] = jnp.zeros_like(pool_ref)

    pool_ref[...] += jnp.sum(h3, axis=0, keepdims=True)

    # ---- head (DNN + attention + classifier + log_softmax), once per batch row ----
    @pl.when(t == nt - 1)
    def _():
        c = pool_ref[...] * (1.0 / L)                                    # (1, 256) f32

        d = hand_ref[0]                                                  # (1, FEAT) f32
        d = jnp.maximum(jnp.dot(d.astype(bf16), dw1_ref[...],
                                preferred_element_type=f32) + db1_ref[...], 0.0)
        d = jnp.maximum(jnp.dot(d.astype(bf16), dw2_ref[...],
                                preferred_element_type=f32) + db2_ref[...], 0.0)
        d = jnp.maximum(jnp.dot(d.astype(bf16), dw3_ref[...],
                                preferred_element_type=f32) + db3_ref[...], 0.0)  # (1, 32)

        # attention fc1(relu) on concat([c, d]) via split weights; fc2 -> sigmoid
        a = jnp.maximum(
            jnp.dot(c.astype(bf16), wa1c_ref[...], preferred_element_type=f32)
            + jnp.dot(d.astype(bf16), wa1d_ref[...], preferred_element_type=f32)
            + ba1_ref[...], 0.0)                                         # (1, 288)
        sgate = jax.nn.sigmoid(jnp.sum(a * wa2_ref[...], axis=1, keepdims=True)
                               + ba2_ref[...])                           # (1, 1)

        logits = (jnp.dot((c * sgate).astype(bf16), wcc_ref[...], preferred_element_type=f32)
                  + jnp.dot((d * sgate).astype(bf16), wcd_ref[...], preferred_element_type=f32)
                  + bc_ref[...])                                         # (1, 10)

        z = logits - jnp.max(logits, axis=1, keepdims=True)
        o_ref[0] = z - jnp.log(jnp.sum(jnp.exp(z), axis=1, keepdims=True))


# ---------------------------------------------------------------------------
# Full model wrapper.
# ---------------------------------------------------------------------------
def hkddnet_forward(iq_data, handcrafted, params, *, tile_target=2048):
    """iq_data: (B, 2, L) NCL like PyTorch; handcrafted: (B, FEAT). Returns (B, 10) log-probs."""
    x = jnp.transpose(iq_data, (0, 2, 1)).astype(jnp.float32)            # (B, L, 2)
    B, L, Cin = x.shape
    FEAT = handcrafted.shape[1]

    TL = _pick_tile(L, tile_target)
    nt = -(-L // TL)
    L_pad = nt * TL

    # Host-side: pad the tiny 2-channel input once, fold the 3 conv1 taps into the
    # channel dim (-> 6 channels, bf16), and gather per-tile windows with a 4-row halo.
    # All conv zero-padding semantics are then resolved inside the kernel.
    x_pad = jnp.pad(x, ((0, 0), (3, L_pad - L + 3), (0, 0)))             # (B, L_pad+6, 2)
    xf = jnp.concatenate([x_pad[:, 0:L_pad + 4], x_pad[:, 1:L_pad + 5],
                          x_pad[:, 2:L_pad + 6]], axis=2).astype(jnp.bfloat16)  # (B, L_pad+4, 6)
    win = (jnp.arange(nt) * TL)[:, None] + jnp.arange(TL + 4)[None, :]   # (nt, TL+4)
    x_halo = xf[:, win, :]                                               # (B, nt, TL+4, 6)
    # TODO(synk): the halo gather could be replaced by a manual double-buffered DMA
    # (memory_space=pl.ANY); kept as a single cheap XLA gather of the 6-channel input.

    bf = lambda a: a.astype(jnp.bfloat16)
    C1, C2, C3 = params["conv1_w"].shape[-1], params["conv2_w"].shape[-1], params["conv3_w"].shape[-1]
    w1f = bf(params["conv1_w"].reshape(3 * Cin, C1))
    w2f = bf(params["conv2_w"].reshape(3 * C1, C2))
    w3f = bf(params["conv3_w"].reshape(3 * C2, C3))
    hand3 = handcrafted.astype(jnp.float32).reshape(B, 1, FEAT)

    conv_args = (x_halo, w1f, params["conv1_b"], w2f, params["conv2_b"], w3f, params["conv3_b"])
    head_args = (hand3,
                 bf(params["dnn_w1"]), params["dnn_b1"],
                 bf(params["dnn_w2"]), params["dnn_b2"],
                 bf(params["dnn_w3"]), params["dnn_b3"],
                 bf(params["attn_w1_c"]), bf(params["attn_w1_d"]), params["attn_b1"],
                 params["attn_w2"], params["attn_b2"],
                 bf(params["cls_w_c"]), bf(params["cls_w_d"]), params["cls_b"])

    def fixed(shape):
        return pl.BlockSpec(shape, lambda b, t: (0,) * len(shape))

    in_specs = ([pl.BlockSpec((1, 1, TL + 4, 3 * Cin), lambda b, t: (b, t, 0, 0))]
                + [fixed(a.shape) for a in conv_args[1:]]
                + [pl.BlockSpec((1, 1, FEAT), lambda b, t: (b, 0, 0))]
                + [fixed(a.shape) for a in head_args[1:]])

    kernel = functools.partial(_hkdd_fused_kernel, L=L, TL=TL)
    out = pl.pallas_call(
        kernel,
        out_shape=jax.ShapeDtypeStruct((B, 1, 10), jnp.float32),
        grid=(B, nt),
        in_specs=in_specs,
        out_specs=pl.BlockSpec((1, 1, 10), lambda b, t: (b, 0, 0)),
        scratch_shapes=[pltpu.VMEM((1, C3), jnp.float32)],
        compiler_params=pltpu.CompilerParams(
            dimension_semantics=("parallel", "arbitrary")),
    )(*conv_args, *head_args)
    return out.reshape(B, 10)


# ---------------------------------------------------------------------------
# Deterministic parameter init (synthetic, not a checkpoint).
# Conv weights are stored as (k, Cin, Cout); a PyTorch Conv1d weight (Cout, Cin, k)
# converts via w.transpose(2, 1, 0).  Linear weights are stored as (in, out).
# ---------------------------------------------------------------------------
def init_params(key, feat_dim):
    def nrm(k, shape, scale=0.1):
        return scale * jax.random.normal(k, shape, jnp.float32)

    ks = jax.random.split(key, 24)
    attn_w1 = nrm(ks[14], (288, 288))
    cls_w = nrm(ks[18], (288, 10))
    return {
        "conv1_w": nrm(ks[0], (3, 2, 64)),    "conv1_b": nrm(ks[1], (1, 64)),
        "conv2_w": nrm(ks[2], (3, 64, 128)),  "conv2_b": nrm(ks[3], (1, 128)),
        "conv3_w": nrm(ks[4], (3, 128, 256)), "conv3_b": nrm(ks[5], (1, 256)),
        "dnn_w1": nrm(ks[6], (feat_dim, 128)), "dnn_b1": nrm(ks[7], (1, 128)),
        "dnn_w2": nrm(ks[8], (128, 64)),       "dnn_b2": nrm(ks[9], (1, 64)),
        "dnn_w3": nrm(ks[10], (64, 32)),       "dnn_b3": nrm(ks[11], (1, 32)),
        "attn_w1_c": attn_w1[:256], "attn_w1_d": attn_w1[256:],
        "attn_b1": nrm(ks[15], (1, 288)),
        "attn_w2": nrm(ks[16], (1, 288)),      "attn_b2": nrm(ks[17], (1, 1)),
        "cls_w_c": cls_w[:256], "cls_w_d": cls_w[256:],
        "cls_b": nrm(ks[19], (1, 10)),
    }


# ---------------------------------------------------------------------------
# Pure-JAX f32 reference for verification.
# ---------------------------------------------------------------------------
def reference_forward(iq_data, handcrafted, p):
    x = jnp.transpose(iq_data, (0, 2, 1)).astype(jnp.float32)
    L = x.shape[1]
    for wname, bname in (("conv1_w", "conv1_b"), ("conv2_w", "conv2_b"), ("conv3_w", "conv3_b")):
        w, b = p[wname], p[bname]
        xp = jnp.pad(x, ((0, 0), (1, 1), (0, 0)))
        x = jnp.maximum(sum(jnp.einsum("blc,co->blo", xp[:, k:k + L], w[k]) for k in range(3)) + b, 0.0)
    c = jnp.mean(x, axis=1)
    d = handcrafted.astype(jnp.float32)
    d = jnp.maximum(d @ p["dnn_w1"] + p["dnn_b1"], 0.0)
    d = jnp.maximum(d @ p["dnn_w2"] + p["dnn_b2"], 0.0)
    d = jnp.maximum(d @ p["dnn_w3"] + p["dnn_b3"], 0.0)
    fc = jnp.concatenate([c, d], axis=1)
    a = jnp.maximum(fc @ jnp.concatenate([p["attn_w1_c"], p["attn_w1_d"]], axis=0) + p["attn_b1"], 0.0)
    s = jax.nn.sigmoid(a @ p["attn_w2"].T + p["attn_b2"])
    fa = fc * s
    logits = fa @ jnp.concatenate([p["cls_w_c"], p["cls_w_d"]], axis=0) + p["cls_b"]
    return jax.nn.log_softmax(logits, axis=1)


if __name__ == "__main__":
    B, L, FEAT = 2, 16, 24
    key = jax.random.PRNGKey(0)
    k_iq, k_hand, k_par = jax.random.split(key, 3)

    iq_data = jax.random.normal(k_iq, (B, 2, L), jnp.float32)         # (B, 2, L) NCL
    handcrafted = jax.random.normal(k_hand, (B, FEAT), jnp.float32)   # (B, FEAT)
    params = init_params(k_par, FEAT)

    out = jax.jit(hkddnet_forward)(iq_data, handcrafted, params)
    out = jax.block_until_ready(out)

    ref = reference_forward(iq_data, handcrafted, params)
    assert out.shape == (B, 10)
    # bf16 MXU inputs -> looser tolerance vs. the pure-f32 reference
    assert jnp.allclose(out, ref, rtol=2e-2, atol=2e-2), "mismatch vs JAX reference"

    print("KERNEL_OK")
</pallas_src>

<mosaic_0001>
module attributes {stable_mosaic.version = 11 : i64} {
  func.func @_hkdd_fused_kernel(%arg0: i32, %arg1: i32, %arg2: memref<1x1x20x6xbf16, #tpu.memory_space<vmem>>, %arg3: memref<6x64xbf16, #tpu.memory_space<vmem>>, %arg4: memref<1x64xf32, #tpu.memory_space<vmem>>, %arg5: memref<192x128xbf16, #tpu.memory_space<vmem>>, %arg6: memref<1x128xf32, #tpu.memory_space<vmem>>, %arg7: memref<384x256xbf16, #tpu.memory_space<vmem>>, %arg8: memref<1x256xf32, #tpu.memory_space<vmem>>, %arg9: memref<1x1x24xf32, #tpu.memory_space<vmem>>, %arg10: memref<24x128xbf16, #tpu.memory_space<vmem>>, %arg11: memref<1x128xf32, #tpu.memory_space<vmem>>, %arg12: memref<128x64xbf16, #tpu.memory_space<vmem>>, %arg13: memref<1x64xf32, #tpu.memory_space<vmem>>, %arg14: memref<64x32xbf16, #tpu.memory_space<vmem>>, %arg15: memref<1x32xf32, #tpu.memory_space<vmem>>, %arg16: memref<256x288xbf16, #tpu.memory_space<vmem>>, %arg17: memref<32x288xbf16, #tpu.memory_space<vmem>>, %arg18: memref<1x288xf32, #tpu.memory_space<vmem>>, %arg19: memref<1x288xf32, #tpu.memory_space<vmem>>, %arg20: memref<1x1xf32, #tpu.memory_space<vmem>>, %arg21: memref<256x10xbf16, #tpu.memory_space<vmem>>, %arg22: memref<32x10xbf16, #tpu.memory_space<vmem>>, %arg23: memref<1x10xf32, #tpu.memory_space<vmem>>, %arg24: memref<1x1x10xf32, #tpu.memory_space<vmem>>, %arg25: memref<1x256xf32, #tpu.memory_space<vmem>>) attributes {dimension_semantics = [#tpu.dimension_semantics<parallel>, #tpu.dimension_semantics<arbitrary>], iteration_bounds = array<i64: 2, 1>, scalar_prefetch = 0 : i64, scratch_operands = 1 : i64, tpu.core_type = #tpu.core_type<tc>, window_params = [{transform_indices = @transform_0, window_bounds = array<i64: 1, 1, 20, 6>}, {pipeline_mode = #tpu.pipeline_mode<synchronous>, transform_indices = @transform_1, window_bounds = array<i64: 6, 64>}, {pipeline_mode = #tpu.pipeline_mode<synchronous>, transform_indices = @transform_2, window_bounds = array<i64: 1, 64>}, {pipeline_mode = #tpu.pipeline_mode<synchronous>, transform_indices = @transform_3, window_bounds = array<i64: 192, 128>}, {pipeline_mode = #tpu.pipeline_mode<synchronous>, transform_indices = @transform_4, window_bounds = array<i64: 1, 128>}, {pipeline_mode = #tpu.pipeline_mode<synchronous>, transform_indices = @transform_5, window_bounds = array<i64: 384, 256>}, {pipeline_mode = #tpu.pipeline_mode<synchronous>, transform_indices = @transform_6, window_bounds = array<i64: 1, 256>}, {transform_indices = @transform_7, window_bounds = array<i64: 1, 1, 24>}, {pipeline_mode = #tpu.pipeline_mode<synchronous>, transform_indices = @transform_8, window_bounds = array<i64: 24, 128>}, {pipeline_mode = #tpu.pipeline_mode<synchronous>, transform_indices = @transform_9, window_bounds = array<i64: 1, 128>}, {pipeline_mode = #tpu.pipeline_mode<synchronous>, transform_indices = @transform_10, window_bounds = array<i64: 128, 64>}, {pipeline_mode = #tpu.pipeline_mode<synchronous>, transform_indices = @transform_11, window_bounds = array<i64: 1, 64>}, {pipeline_mode = #tpu.pipeline_mode<synchronous>, transform_indices = @transform_12, window_bounds = array<i64: 64, 32>}, {pipeline_mode = #tpu.pipeline_mode<synchronous>, transform_indices = @transform_13, window_bounds = array<i64: 1, 32>}, {pipeline_mode = #tpu.pipeline_mode<synchronous>, transform_indices = @transform_14, window_bounds = array<i64: 256, 288>}, {pipeline_mode = #tpu.pipeline_mode<synchronous>, transform_indices = @transform_15, window_bounds = array<i64: 32, 288>}, {pipeline_mode = #tpu.pipeline_mode<synchronous>, transform_indices = @transform_16, window_bounds = array<i64: 1, 288>}, {pipeline_mode = #tpu.pipeline_mode<synchronous>, transform_indices = @transform_17, window_bounds = array<i64: 1, 288>}, {pipeline_mode = #tpu.pipeline_mode<synchronous>, transform_indices = @transform_18, window_bounds = array<i64: 1, 1>}, {pipeline_mode = #tpu.pipeline_mode<synchronous>, transform_indices = @transform_19, window_bounds = array<i64: 256, 10>}, {pipeline_mode = #tpu.pipeline_mode<synchronous>, transform_indices = @transform_20, window_bounds = array<i64: 32, 10>}, {pipeline_mode = #tpu.pipeline_mode<synchronous>, transform_indices = @transform_21, window_bounds = array<i64: 1, 10>}, {transform_indices = @transform_22, window_bounds = array<i64: 1, 1, 10>}]} {
    %c16_i32 = arith.constant 16 : i32
    %0 = arith.muli %arg1, %c16_i32 : i32
    %c0_i32 = arith.constant 0 : i32
    %1 = arith.cmpi eq, %arg1, %c0_i32 : i32
    %c-1_i32 = arith.constant -1 : i32
    %2 = arith.cmpi sge, %arg1, %c-1_i32 : i32
    %3 = arith.ori %1, %2 : i1
    %c0 = arith.constant 0 : index
    %c0_0 = arith.constant 0 : index
    %c0_1 = arith.constant 0 : index
    %c0_2 = arith.constant 0 : index
    %4 = vector.load %arg2[%c0, %c0_0, %c0_1, %c0_2] : memref<1x1x20x6xbf16, #tpu.memory_space<vmem>>, vector<1x1x20x6xbf16>
    %5 = vector.shape_cast %4 : vector<1x1x20x6xbf16> to vector<20x6xbf16>
    %c0_3 = arith.constant 0 : index
    %c0_4 = arith.constant 0 : index
    %6 = vector.load %arg3[%c0_3, %c0_4] : memref<6x64xbf16, #tpu.memory_space<vmem>>, vector<6x64xbf16>
    %cst = arith.constant dense<0.000000e+00> : vector<20x64xf32>
    %7 = tpu.matmul %5, %6, %cst {dimension_numbers = #tpu.dot_dimension_numbers<[1], [0], [0], [1], [0, 0, 1, 1], [], []>} : vector<20x6xbf16>, vector<6x64xbf16>, vector<20x64xf32> -> vector<20x64xf32>
    %c0_5 = arith.constant 0 : index
    %c0_6 = arith.constant 0 : index
    %8 = vector.load %arg4[%c0_5, %c0_6] : memref<1x64xf32, #tpu.memory_space<vmem>>, vector<1x64xf32>
    %9 = vector.broadcast %8 : vector<1x64xf32> to vector<20x64xf32>
    %10 = arith.addf %7, %9 : vector<20x64xf32>
    %cst_7 = arith.constant 0.000000e+00 : f32
    %11 = vector.broadcast %cst_7 : f32 to vector<20x64xf32>
    %12 = arith.maximumf %10, %11 : vector<20x64xf32>
    %13 = arith.truncf %12 : vector<20x64xf32> to vector<20x64xbf16>
    %c2_i32 = arith.constant 2 : i32
    %14 = arith.subi %0, %c2_i32 : i32
    %15 = arith.extui %3 : i1 to i32
    %c0_i32_8 = arith.constant 0 : i32
    %16 = arith.cmpi ne, %15, %c0_i32_8 : i32
    %17 = scf.if %16 -> (vector<20x64xbf16>) {
      %56 = tpu.iota {dimensions = array<i32: 0>} : vector<20x1xi32>
      %57 = vector.broadcast %14 : i32 to vector<20x1xi32>
      %58 = arith.addi %57, %56 : vector<20x1xi32>
      %c0_i32_31 = arith.constant 0 : i32
      %59 = vector.broadcast %c0_i32_31 : i32 to vector<20x1xi32>
      %60 = arith.cmpi sge, %58, %59 : vector<20x1xi32>
      %c16_i32_32 = arith.constant 16 : i32
      %61 = vector.broadcast %c16_i32_32 : i32 to vector<20x1xi32>
      %62 = arith.cmpi slt, %58, %61 : vector<20x1xi32>
      %63 = arith.andi %60, %62 : vector<20x1xi1>
      %cst_33 = arith.constant 0.000000e+00 : f32
      %64 = arith.truncf %cst_33 : f32 to bf16
      %65 = vector.shape_cast %63 : vector<20x1xi1> to vector<20x1xi1>
      %66 = vector.broadcast %65 : vector<20x1xi1> to vector<20x64xi1>
      %67 = vector.broadcast %64 : bf16 to vector<20x64xbf16>
      %68 = arith.select %66, %13, %67 : vector<20x64xi1>, vector<20x64xbf16>
      scf.yield %68 : vector<20x64xbf16>
    } else {
      scf.yield %13 : vector<20x64xbf16>
    }
    %18 = vector.extract_strided_slice %17 {offsets = [0, 0], sizes = [18, 64], strides = [1, 1]} : vector<20x64xbf16> to vector<18x64xbf16>
    %19 = vector.extract_strided_slice %17 {offsets = [1, 0], sizes = [18, 64], strides = [1, 1]} : vector<20x64xbf16> to vector<18x64xbf16>
    %20 = vector.extract_strided_slice %17 {offsets = [2, 0], sizes = [18, 64], strides = [1, 1]} : vector<20x64xbf16> to vector<18x64xbf16>
    %21 = tpu.concatenate %18, %19, %20 in 1 : vector<18x64xbf16>, vector<18x64xbf16>, vector<18x64xbf16> -> vector<18x192xbf16>
    %c0_9 = arith.constant 0 : index
    %c0_10 = arith.constant 0 : index
    %22 = vector.load %arg5[%c0_9, %c0_10] : memref<192x128xbf16, #tpu.memory_space<vmem>>, vector<192x128xbf16>
    %cst_11 = arith.constant dense<0.000000e+00> : vector<18x128xf32>
    %23 = tpu.matmul %21, %22, %cst_11 {dimension_numbers = #tpu.dot_dimension_numbers<[1], [0], [0], [1], [0, 0, 1, 1], [], []>} : vector<18x192xbf16>, vector<192x128xbf16>, vector<18x128xf32> -> vector<18x128xf32>
    %c0_12 = arith.constant 0 : index
    %c0_13 = arith.constant 0 : index
    %24 = vector.load %arg6[%c0_12, %c0_13] : memref<1x128xf32, #tpu.memory_space<vmem>>, vector<1x128xf32>
    %25 = vector.broadcast %24 : vector<1x128xf32> to vector<18x128xf32>
    %26 = arith.addf %23, %25 : vector<18x128xf32>
    %cst_14 = arith.constant 0.000000e+00 : f32
    %27 = vector.broadcast %cst_14 : f32 to vector<18x128xf32>
    %28 = arith.maximumf %26, %27 : vector<18x128xf32>
    %29 = arith.truncf %28 : vector<18x128xf32> to vector<18x128xbf16>
    %c1_i32 = arith.constant 1 : i32
    %30 = arith.subi %0, %c1_i32 : i32
    %31 = arith.extui %3 : i1 to i32
    %c0_i32_15 = arith.constant 0 : i32
    %32 = arith.cmpi ne, %31, %c0_i32_15 : i32
    %33 = scf.if %32 -> (vector<18x128xbf16>) {
      %56 = tpu.iota {dimensions = array<i32: 0>} : vector<18x1xi32>
      %57 = vector.broadcast %30 : i32 to vector<18x1xi32>
      %58 = arith.addi %57, %56 : vector<18x1xi32>
      %c0_i32_31 = arith.constant 0 : i32
      %59 = vector.broadcast %c0_i32_31 : i32 to vector<18x1xi32>
      %60 = arith.cmpi sge, %58, %59 : vector<18x1xi32>
      %c16_i32_32 = arith.constant 16 : i32
      %61 = vector.broadcast %c16_i32_32 : i32 to vector<18x1xi32>
      %62 = arith.cmpi slt, %58, %61 : vector<18x1xi32>
      %63 = arith.andi %60, %62 : vector<18x1xi1>
      %cst_33 = arith.constant 0.000000e+00 : f32
      %64 = arith.truncf %cst_33 : f32 to bf16
      %65 = vector.shape_cast %63 : vector<18x1xi1> to vector<18x1xi1>
      %66 = vector.broadcast %65 : vector<18x1xi1> to vector<18x128xi1>
      %67 = vector.broadcast %64 : bf16 to vector<18x128xbf16>
      %68 = arith.select %66, %29, %67 : vector<18x128xi1>, vector<18x128xbf16>
      scf.yield %68 : vector<18x128xbf16>
    } else {
      scf.yield %29 : vector<18x128xbf16>
    }
    %34 = vector.extract_strided_slice %33 {offsets = [0, 0], sizes = [16, 128], strides = [1, 1]} : vector<18x128xbf16> to vector<16x128xbf16>
    %35 = vector.extract_strided_slice %33 {offsets = [1, 0], sizes = [16, 128], strides = [1, 1]} : vector<18x128xbf16> to vector<16x128xbf16>
    %36 = vector.extract_strided_slice %33 {offsets = [2, 0], sizes = [16, 128], strides = [1, 1]} : vector<18x128xbf16> to vector<16x128xbf16>
    %37 = tpu.concatenate %34, %35, %36 in 1 : vector<16x128xbf16>, vector<16x128xbf16>, vector<16x128xbf16> -> vector<16x384xbf16>
    %c0_16 = arith.constant 0 : index
    %c0_17 = arith.constant 0 : index
    %38 = vector.load %arg7[%c0_16, %c0_17] : memref<384x256xbf16, #tpu.memory_space<vmem>>, vector<384x256xbf16>
    %cst_18 = arith.constant dense<0.000000e+00> : vector<16x256xf32>
    %39 = tpu.matmul %37, %38, %cst_18 {dimension_numbers = #tpu.dot_dimension_numbers<[1], [0], [0], [1], [0, 0, 1, 1], [], []>} : vector<16x384xbf16>, vector<384x256xbf16>, vector<16x256xf32> -> vector<16x256xf32>
    %c0_19 = arith.constant 0 : index
    %c0_20 = arith.constant 0 : index
    %40 = vector.load %arg8[%c0_19, %c0_20] : memref<1x256xf32, #tpu.memory_space<vmem>>, vector<1x256xf32>
    %41 = vector.broadcast %40 : vector<1x256xf32> to vector<16x256xf32>
    %42 = arith.addf %39, %41 : vector<16x256xf32>
    %cst_21 = arith.constant 0.000000e+00 : f32
    %43 = vector.broadcast %cst_21 : f32 to vector<16x256xf32>
    %44 = arith.maximumf %42, %43 : vector<16x256xf32>
    %c0_i32_22 = arith.constant 0 : i32
    %45 = arith.cmpi eq, %arg1, %c0_i32_22 : i32
    %46 = arith.extui %45 : i1 to i32
    %c0_i32_23 = arith.constant 0 : i32
    %47 = arith.cmpi ne, %46, %c0_i32_23 : i32
    scf.if %47 {
      %cst_31 = arith.constant 0.000000e+00 : f32
      %56 = vector.broadcast %cst_31 : f32 to vector<1x256xf32>
      %c0_32 = arith.constant 0 : index
      %c0_33 = arith.constant 0 : index
      %57 = vector.load %arg25[%c0_32, %c0_33] : memref<1x256xf32, #tpu.memory_space<vmem>>, vector<1x256xf32>
      tpu.vector_store %arg25[%c0_32, %c0_33], %56 {strides = array<i32>} : memref<1x256xf32, #tpu.memory_space<vmem>>, vector<1x256xf32>,
    } else {
    }
    %c0_24 = arith.constant 0 : index
    %c0_25 = arith.constant 0 : index
    %48 = vector.load %arg25[%c0_24, %c0_25] : memref<1x256xf32, #tpu.memory_space<vmem>>, vector<1x256xf32>
    %cst_26 = arith.constant dense<0.000000e+00> : vector<256xf32>
    %49 = vector.multi_reduction <add>, %44, %cst_26 [0] : vector<16x256xf32> to vector<256xf32>
    %50 = vector.shape_cast %49 : vector<256xf32> to vector<1x256xf32>
    %51 = arith.addf %48, %50 : vector<1x256xf32>
    %c0_27 = arith.constant 0 : index
    %c0_28 = arith.constant 0 : index
    %52 = vector.load %arg25[%c0_27, %c0_28] : memref<1x256xf32, #tpu.memory_space<vmem>>, vector<1x256xf32>
    tpu.vector_store %arg25[%c0_27, %c0_28], %51 {strides = array<i32>} : memref<1x256xf32, #tpu.memory_space<vmem>>, vector<1x256xf32>,
    %c0_i32_29 = arith.constant 0 : i32
    %53 = arith.cmpi eq, %arg1, %c0_i32_29 : i32
    %54 = arith.extui %53 : i1 to i32
    %c0_i32_30 = arith.constant 0 : i32
    %55 = arith.cmpi ne, %54, %c0_i32_30 : i32
    scf.if %55 {
      %c0_31 = arith.constant 0 : index
      %c0_32 = arith.constant 0 : index
      %56 = vector.load %arg25[%c0_31, %c0_32] : memref<1x256xf32, #tpu.memory_space<vmem>>, vector<1x256xf32>
      %cst_33 = arith.constant 6.250000e-02 : f32
      %57 = vector.broadcast %cst_33 : f32 to vector<1x256xf32>
      %58 = arith.mulf %56, %57 : vector<1x256xf32>
      %c0_34 = arith.constant 0 : index
      %c0_35 = arith.constant 0 : index
      %c0_36 = arith.constant 0 : index
      %59 = vector.load %arg9[%c0_34, %c0_35, %c0_36] : memref<1x1x24xf32, #tpu.memory_space<vmem>>, vector<1x1x24xf32>
      %60 = vector.shape_cast %59 : vector<1x1x24xf32> to vector<1x24xf32>
      %61 = arith.truncf %60 : vector<1x24xf32> to vector<1x24xbf16>
      %c0_37 = arith.constant 0 : index
      %c0_38 = arith.constant 0 : index
      %62 = vector.load %arg10[%c0_37, %c0_38] : memref<24x128xbf16, #tpu.memory_space<vmem>>, vector<24x128xbf16>
      %cst_39 = arith.constant dense<0.000000e+00> : vector<1x128xf32>
      %63 = tpu.matmul %61, %62, %cst_39 {dimension_numbers = #tpu.dot_dimension_numbers<[1], [0], [0], [1], [0, 0, 1, 1], [], []>} : vector<1x24xbf16>, vector<24x128xbf16>, vector<1x128xf32> -> vector<1x128xf32>
      %c0_40 = arith.constant 0 : index
      %c0_41 = arith.constant 0 : index
      %64 = vector.load %arg11[%c0_40, %c0_41] : memref<1x128xf32, #tpu.memory_space<vmem>>, vector<1x128xf32>
      %65 = arith.addf %63, %64 : vector<1x128xf32>
      %cst_42 = arith.constant 0.000000e+00 : f32
      %66 = vector.broadcast %cst_42 : f32 to vector<1x128xf32>
      %67 = arith.maximumf %65, %66 : vector<1x128xf32>
      %68 = arith.truncf %67 : vector<1x128xf32> to vector<1x128xbf16>
      %c0_43 = arith.constant 0 : index
      %c0_44 = arith.constant 0 : index
      %69 = vector.load %arg12[%c0_43, %c0_44] : memref<128x64xbf16, #tpu.memory_space<vmem>>, vector<128x64xbf16>
      %cst_45 = arith.constant dense<0.000000e+00> : vector<1x64xf32>
      %70 = tpu.matmul %68, %69, %cst_45 {dimension_numbers = #tpu.dot_dimension_numbers<[1], [0], [0], [1], [0, 0, 1, 1], [], []>} : vector<1x128xbf16>, vector<128x64xbf16>, vector<1x64xf32> -> vector<1x64xf32>
      %c0_46 = arith.constant 0 : index
      %c0_47 = arith.constant 0 : index
      %71 = vector.load %arg13[%c0_46, %c0_47] : memref<1x64xf32, #tpu.memory_space<vmem>>, vector<1x64xf32>
      %72 = arith.addf %70, %71 : vector<1x64xf32>
      %cst_48 = arith.constant 0.000000e+00 : f32
      %73 = vector.broadcast %cst_48 : f32 to vector<1x64xf32>
      %74 = arith.maximumf %72, %73 : vector<1x64xf32>
      %75 = arith.truncf %74 : vector<1x64xf32> to vector<1x64xbf16>
      %c0_49 = arith.constant 0 : index
      %c0_50 = arith.constant 0 : index
      %76 = vector.load %arg14[%c0_49, %c0_50] : memref<64x32xbf16, #tpu.memory_space<vmem>>, vector<64x32xbf16>
      %cst_51 = arith.constant dense<0.000000e+00> : vector<1x32xf32>
      %77 = tpu.matmul %75, %76, %cst_51 {dimension_numbers = #tpu.dot_dimension_numbers<[1], [0], [0], [1], [0, 0, 1, 1], [], []>} : vector<1x64xbf16>, vector<64x32xbf16>, vector<1x32xf32> -> vector<1x32xf32>
      %c0_52 = arith.constant 0 : index
      %c0_53 = arith.constant 0 : index
      %78 = vector.load %arg15[%c0_52, %c0_53] : memref<1x32xf32, #tpu.memory_space<vmem>>, vector<1x32xf32>
      %79 = arith.addf %77, %78 : vector<1x32xf32>
      %cst_54 = arith.constant 0.000000e+00 : f32
      %80 = vector.broadcast %cst_54 : f32 to vector<1x32xf32>
      %81 = arith.maximumf %79, %80 : vector<1x32xf32>
      %82 = arith.truncf %58 : vector<1x256xf32> to vector<1x256xbf16>
      %c0_55 = arith.constant 0 : index
      %c0_56 = arith.constant 0 : index
      %83 = vector.load %arg16[%c0_55, %c0_56] : memref<256x288xbf16, #tpu.memory_space<vmem>>, vector<256x288xbf16>
      %cst_57 = arith.constant dense<0.000000e+00> : vector<1x288xf32>
      %84 = tpu.matmul %82, %83, %cst_57 {dimension_numbers = #tpu.dot_dimension_numbers<[1], [0], [0], [1], [0, 0, 1, 1], [], []>} : vector<1x256xbf16>, vector<256x288xbf16>, vector<1x288xf32> -> vector<1x288xf32>
      %85 = arith.truncf %81 : vector<1x32xf32> to vector<1x32xbf16>
      %c0_58 = arith.constant 0 : index
      %c0_59 = arith.constant 0 : index
      %86 = vector.load %arg17[%c0_58, %c0_59] : memref<32x288xbf16, #tpu.memory_space<vmem>>, vector<32x288xbf16>
      %cst_60 = arith.constant dense<0.000000e+00> : vector<1x288xf32>
      %87 = tpu.matmul %85, %86, %cst_60 {dimension_numbers = #tpu.dot_dimension_numbers<[1], [0], [0], [1], [0, 0, 1, 1], [], []>} : vector<1x32xbf16>, vector<32x288xbf16>, vector<1x288xf32> -> vector<1x288xf32>
      %88 = arith.addf %84, %87 : vector<1x288xf32>
      %c0_61 = arith.constant 0 : index
      %c0_62 = arith.constant 0 : index
      %89 = vector.load %arg18[%c0_61, %c0_62] : memref<1x288xf32, #tpu.memory_space<vmem>>, vector<1x288xf32>
      %90 = arith.addf %88, %89 : vector<1x288xf32>
      %cst_63 = arith.constant 0.000000e+00 : f32
      %91 = vector.broadcast %cst_63 : f32 to vector<1x288xf32>
      %92 = arith.maximumf %90, %91 : vector<1x288xf32>
      %c0_64 = arith.constant 0 : index
      %c0_65 = arith.constant 0 : index
      %93 = vector.load %arg19[%c0_64, %c0_65] : memref<1x288xf32, #tpu.memory_space<vmem>>, vector<1x288xf32>
      %94 = arith.mulf %92, %93 : vector<1x288xf32>
      %cst_66 = arith.constant dense<0.000000e+00> : vector<1xf32>
      %95 = vector.multi_reduction <add>, %94, %cst_66 [1] : vector<1x288xf32> to vector<1xf32>
      %96 = vector.shape_cast %95 : vector<1xf32> to vector<1x1xf32>
      %c0_67 = arith.constant 0 : index
      %c0_68 = arith.constant 0 : index
      %97 = vector.load %arg20[%c0_67, %c0_68] : memref<1x1xf32, #tpu.memory_space<vmem>>, vector<1x1xf32>
      %98 = arith.addf %96, %97 : vector<1x1xf32>
      %99 = arith.negf %98 : vector<1x1xf32>
      %100 = math.exp %99 : vector<1x1xf32>
      %cst_69 = arith.constant 1.000000e+00 : f32
      %101 = vector.broadcast %cst_69 : f32 to vector<1x1xf32>
      %102 = arith.addf %101, %100 : vector<1x1xf32>
      %103 = arith.divf %101, %102 : vector<1x1xf32>
      %104 = vector.broadcast %103 : vector<1x1xf32> to vector<1x256xf32>
      %105 = arith.mulf %58, %104 : vector<1x256xf32>
      %106 = arith.truncf %105 : vector<1x256xf32> to vector<1x256xbf16>
      %c0_70 = arith.constant 0 : index
      %c0_71 = arith.constant 0 : index
      %107 = vector.load %arg21[%c0_70, %c0_71] : memref<256x10xbf16, #tpu.memory_space<vmem>>, vector<256x10xbf16>
      %cst_72 = arith.constant dense<0.000000e+00> : vector<1x10xf32>
      %108 = tpu.matmul %106, %107, %cst_72 {dimension_numbers = #tpu.dot_dimension_numbers<[1], [0], [0], [1], [0, 0, 1, 1], [], []>} : vector<1x256xbf16>, vector<256x10xbf16>, vector<1x10xf32> -> vector<1x10xf32>
      %109 = vector.broadcast %103 : vector<1x1xf32> to vector<1x32xf32>
      %110 = arith.mulf %81, %109 : vector<1x32xf32>
      %111 = arith.truncf %110 : vector<1x32xf32> to vector<1x32xbf16>
      %c0_73 = arith.constant 0 : index
      %c0_74 = arith.constant 0 : index
      %112 = vector.load %arg22[%c0_73, %c0_74] : memref<32x10xbf16, #tpu.memory_space<vmem>>, vector<32x10xbf16>
      %cst_75 = arith.constant dense<0.000000e+00> : vector<1x10xf32>
      %113 = tpu.matmul %111, %112, %cst_75 {dimension_numbers = #tpu.dot_dimension_numbers<[1], [0], [0], [1], [0, 0, 1, 1], [], []>} : vector<1x32xbf16>, vector<32x10xbf16>, vector<1x10xf32> -> vector<1x10xf32>
      %114 = arith.addf %108, %113 : vector<1x10xf32>
      %c0_76 = arith.constant 0 : index
      %c0_77 = arith.constant 0 : index
      %115 = vector.load %arg23[%c0_76, %c0_77] : memref<1x10xf32, #tpu.memory_space<vmem>>, vector<1x10xf32>
      %116 = arith.addf %114, %115 : vector<1x10xf32>
      %cst_78 = arith.constant dense<0xFF800000> : vector<1xf32>
      %117 = vector.multi_reduction <maximumf>, %116, %cst_78 [1] : vector<1x10xf32> to vector<1xf32>
      %118 = vector.shape_cast %117 : vector<1xf32> to vector<1x1xf32>
      %119 = vector.broadcast %118 : vector<1x1xf32> to vector<1x10xf32>
      %120 = arith.subf %116, %119 : vector<1x10xf32>
      %121 = math.exp %120 : vector<1x10xf32>
      %cst_79 = arith.constant dense<0.000000e+00> : vector<1xf32>
      %122 = vector.multi_reduction <add>, %121, %cst_79 [1] : vector<1x10xf32> to vector<1xf32>
      %123 = vector.shape_cast %122 : vector<1xf32> to vector<1x1xf32>
      %124 = math.log %123 : vector<1x1xf32>
      %125 = vector.broadcast %124 : vector<1x1xf32> to vector<1x10xf32>
      %126 = arith.subf %120, %125 : vector<1x10xf32>
      %c0_80 = arith.constant 0 : index
      %c0_81 = arith.constant 0 : index
      %c0_82 = arith.constant 0 : index
      %127 = vector.load %arg24[%c0_80, %c0_81, %c0_82] : memref<1x1x10xf32, #tpu.memory_space<vmem>>, vector<1x1x10xf32>
      %128 = vector.shape_cast %127 : vector<1x1x10xf32> to vector<1x10xf32>
      %129 = vector.shape_cast %126 : vector<1x10xf32> to vector<1x1x10xf32>
      tpu.vector_store %arg24[%c0_80, %c0_81, %c0_82], %129 {strides = array<i32>} : memref<1x1x10xf32, #tpu.memory_space<vmem>>, vector<1x1x10xf32>,
    } else {
    }
    return
  }
  func.func @transform_0(%arg0: i32, %arg1: i32) -> (i32, i32, i32, i32) {
    %c0_i32 = arith.constant 0 : i32
    %c0_i32_0 = arith.constant 0 : i32
    %c0_i32_1 = arith.constant 0 : i32
    return %arg0, %arg1, %c0_i32, %c0_i32_0 : i32, i32, i32, i32
  }
  func.func @transform_1(%arg0: i32, %arg1: i32) -> (i32, i32) {
    %c0_i32 = arith.constant 0 : i32
    %c0_i32_0 = arith.constant 0 : i32
    %c0_i32_1 = arith.constant 0 : i32
    return %c0_i32, %c0_i32_0 : i32, i32
  }
  func.func @transform_2(%arg0: i32, %arg1: i32) -> (i32, i32) {
    %c0_i32 = arith.constant 0 : i32
    %c0_i32_0 = arith.constant 0 : i32
    %c0_i32_1 = arith.constant 0 : i32
    return %c0_i32, %c0_i32_0 : i32, i32
  }
  func.func @transform_3(%arg0: i32, %arg1: i32) -> (i32, i32) {
    %c0_i32 = arith.constant 0 : i32
    %c0_i32_0 = arith.constant 0 : i32
    %c0_i32_1 = arith.constant 0 : i32
    return %c0_i32, %c0_i32_0 : i32, i32
  }
  func.func @transform_4(%arg0: i32, %arg1: i32) -> (i32, i32) {
    %c0_i32 = arith.constant 0 : i32
    %c0_i32_0 = arith.constant 0 : i32
    %c0_i32_1 = arith.constant 0 : i32
    return %c0_i32, %c0_i32_0 : i32, i32
  }
  func.func @transform_5(%arg0: i32, %arg1: i32) -> (i32, i32) {
    %c0_i32 = arith.constant 0 : i32
    %c0_i32_0 = arith.constant 0 : i32
    %c0_i32_1 = arith.constant 0 : i32
    return %c0_i32, %c0_i32_0 : i32, i32
  }
  func.func @transform_6(%arg0: i32, %arg1: i32) -> (i32, i32) {
    %c0_i32 = arith.constant 0 : i32
    %c0_i32_0 = arith.constant 0 : i32
    %c0_i32_1 = arith.constant 0 : i32
    return %c0_i32, %c0_i32_0 : i32, i32
  }
  func.func @transform_7(%arg0: i32, %arg1: i32) -> (i32, i32, i32) {
    %c0_i32 = arith.constant 0 : i32
    %c0_i32_0 = arith.constant 0 : i32
    %c0_i32_1 = arith.constant 0 : i32
    return %arg0, %c0_i32, %c0_i32_0 : i32, i32, i32
  }
  func.func @transform_8(%arg0: i32, %arg1: i32) -> (i32, i32) {
    %c0_i32 = arith.constant 0 : i32
    %c0_i32_0 = arith.constant 0 : i32
    %c0_i32_1 = arith.constant 0 : i32
    return %c0_i32, %c0_i32_0 : i32, i32
  }
  func.func @transform_9(%arg0: i32, %arg1: i32) -> (i32, i32) {
    %c0_i32 = arith.constant 0 : i32
    %c0_i32_0 = arith.constant 0 : i32
    %c0_i32_1 = arith.constant 0 : i32
    return %c0_i32, %c0_i32_0 : i32, i32
  }
  func.func @transform_10(%arg0: i32, %arg1: i32) -> (i32, i32) {
    %c0_i32 = arith.constant 0 : i32
    %c0_i32_0 = arith.constant 0 : i32
    %c0_i32_1 = arith.constant 0 : i32
    return %c0_i32, %c0_i32_0 : i32, i32
  }
  func.func @transform_11(%arg0: i32, %arg1: i32) -> (i32, i32) {
    %c0_i32 = arith.constant 0 : i32
    %c0_i32_0 = arith.constant 0 : i32
    %c0_i32_1 = arith.constant 0 : i32
    return %c0_i32, %c0_i32_0 : i32, i32
  }
  func.func @transform_12(%arg0: i32, %arg1: i32) -> (i32, i32) {
    %c0_i32 = arith.constant 0 : i32
    %c0_i32_0 = arith.constant 0 : i32
    %c0_i32_1 = arith.constant 0 : i32
    return %c0_i32, %c0_i32_0 : i32, i32
  }
  func.func @transform_13(%arg0: i32, %arg1: i32) -> (i32, i32) {
    %c0_i32 = arith.constant 0 : i32
    %c0_i32_0 = arith.constant 0 : i32
    %c0_i32_1 = arith.constant 0 : i32
    return %c0_i32, %c0_i32_0 : i32, i32
  }
  func.func @transform_14(%arg0: i32, %arg1: i32) -> (i32, i32) {
    %c0_i32 = arith.constant 0 : i32
    %c0_i32_0 = arith.constant 0 : i32
    %c0_i32_1 = arith.constant 0 : i32
    return %c0_i32, %c0_i32_0 : i32, i32
  }
  func.func @transform_15(%arg0: i32, %arg1: i32) -> (i32, i32) {
    %c0_i32 = arith.constant 0 : i32
    %c0_i32_0 = arith.constant 0 : i32
    %c0_i32_1 = arith.constant 0 : i32
    return %c0_i32, %c0_i32_0 : i32, i32
  }
  func.func @transform_16(%arg0: i32, %arg1: i32) -> (i32, i32) {
    %c0_i32 = arith.constant 0 : i32
    %c0_i32_0 = arith.constant 0 : i32
    %c0_i32_1 = arith.constant 0 : i32
    return %c0_i32, %c0_i32_0 : i32, i32
  }
  func.func @transform_17(%arg0: i32, %arg1: i32) -> (i32, i32) {
    %c0_i32 = arith.constant 0 : i32
    %c0_i32_0 = arith.constant 0 : i32
    %c0_i32_1 = arith.constant 0 : i32
    return %c0_i32, %c0_i32_0 : i32, i32
  }
  func.func @transform_18(%arg0: i32, %arg1: i32) -> (i32, i32) {
    %c0_i32 = arith.constant 0 : i32
    %c0_i32_0 = arith.constant 0 : i32
    %c0_i32_1 = arith.constant 0 : i32
    return %c0_i32, %c0_i32_0 : i32, i32
  }
  func.func @transform_19(%arg0: i32, %arg1: i32) -> (i32, i32) {
    %c0_i32 = arith.constant 0 : i32
    %c0_i32_0 = arith.constant 0 : i32
    %c0_i32_1 = arith.constant 0 : i32
    return %c0_i32, %c0_i32_0 : i32, i32
  }
  func.func @transform_20(%arg0: i32, %arg1: i32) -> (i32, i32) {
    %c0_i32 = arith.constant 0 : i32
    %c0_i32_0 = arith.constant 0 : i32
    %c0_i32_1 = arith.constant 0 : i32
    return %c0_i32, %c0_i32_0 : i32, i32
  }
  func.func @transform_21(%arg0: i32, %arg1: i32) -> (i32, i32) {
    %c0_i32 = arith.constant 0 : i32
    %c0_i32_0 = arith.constant 0 : i32
    %c0_i32_1 = arith.constant 0 : i32
    return %c0_i32, %c0_i32_0 : i32, i32
  }
  func.func @transform_22(%arg0: i32, %arg1: i32) -> (i32, i32, i32) {
    %c0_i32 = arith.constant 0 : i32
    %c0_i32_0 = arith.constant 0 : i32
    %c0_i32_1 = arith.constant 0 : i32
    return %arg0, %c0_i32, %c0_i32_0 : i32, i32, i32
  }
}

</mosaic_0001>

<llo_original>
// kernel: hkddnet_forward.1
$region0: #{hkddnet_forward.1}
  #allocation0 [shape = 'u32[]', space=smem, size = 0x4, offset = 0x4, fixed_abs, tag = 'smem constant byte address 0x4 - core index']
  #allocation1 [shape = 'u32[144,128]{1,0:T(1,128)}', space=vmem, size = 0x12000, scoped, tag = 'internal scratch']
  #allocation2 [shape = 'f32[1,256]{1,0:T(1,128)}', space=vmem, size = 0x400, scoped, tag = 'scratch operand']
  #allocation3 [shape = 'f32[1,1]{1,0:T(1,128)S(1)}', space=vmem, size = 0x200, scoped, tag = 'scoped memory for hkddnet_forward.1']
  %s0 = inlined_call_operand.vmem [shape: bf16[2,1,20,6], index: 0, kind: input, shape index: {}]
  %s1 = inlined_call_operand.vmem [shape: bf16[6,64], index: 1, kind: input, shape index: {}]
  %s2 = inlined_call_operand.vmem [shape: f32[1,64], index: 2, kind: input, shape index: {}]
  %s3 = inlined_call_operand.vmem [shape: bf16[192,128], index: 3, kind: input, shape index: {}]
  %s4 = inlined_call_operand.vmem [shape: f32[1,128], index: 4, kind: input, shape index: {}]
  %s5 = inlined_call_operand.vmem [shape: bf16[384,256], index: 5, kind: input, shape index: {}]
  %s6 = inlined_call_operand.vmem [shape: f32[1,256], index: 6, kind: input, shape index: {}]
  %s7 = inlined_call_operand.vmem [shape: f32[2,1,24], index: 7, kind: input, shape index: {}]
  %s8 = inlined_call_operand.vmem [shape: bf16[24,128], index: 8, kind: input, shape index: {}]
  %s9 = inlined_call_operand.vmem [shape: f32[1,128], index: 9, kind: input, shape index: {}]
  %s10 = inlined_call_operand.vmem [shape: bf16[128,64], index: 10, kind: input, shape index: {}]
  %s11 = inlined_call_operand.vmem [shape: f32[1,64], index: 11, kind: input, shape index: {}]
  %s12 = inlined_call_operand.vmem [shape: bf16[64,32], index: 12, kind: input, shape index: {}]
  %s13 = inlined_call_operand.vmem [shape: f32[1,32], index: 13, kind: input, shape index: {}]
  %s14 = inlined_call_operand.vmem [shape: bf16[256,288], index: 14, kind: input, shape index: {}]
  %s15 = inlined_call_operand.vmem [shape: bf16[32,288], index: 15, kind: input, shape index: {}]
  %s16 = inlined_call_operand.vmem [shape: f32[1,288], index: 16, kind: input, shape index: {}]
  %s17 = inlined_call_operand.vmem [shape: f32[1,288], index: 17, kind: input, shape index: {}]
  %s18 = inlined_call_operand.<no memory space> [shape: f32[1,1], index: 18, kind: input, shape index: {}]
  %s19 = inlined_call_operand.vmem [shape: bf16[256,10], index: 19, kind: input, shape index: {}]
  %s20 = inlined_call_operand.vmem [shape: bf16[32,10], index: 20, kind: input, shape index: {}]
  %s21 = inlined_call_operand.vmem [shape: f32[1,10], index: 21, kind: input, shape index: {}]
  %s22 = inlined_call_operand.hbm [shape: f32[2,1,10], index: 22, kind: output, shape index: {}]
  %s23 = sld [smem:[#allocation0]]
  $region145: #{hkddnet_forward.1} parent=0
    _
  %s25 = ssub.s32 1, %s23
  %s26 = scalar_select 0, %s25, %s23
  %v27 = vstv %s18
  %28 = vst [vmem:[#allocation3] sm:$0x1] %v27
  $region1: #{hkddnet_forward.1} parent=0
    #allocation4 [shape = 'u8[1024]{0}', space=vmem, size = 0x400, scoped, tag = 'output window, operand 0']
    #allocation5 [shape = 's32[2]{0}', space=sflag, size = 0x8, scoped, tag = 'scoped memory for hkddnet_forward.1']
    %29 = vsyncpa [#allocation5], 0
    %s30 = scalar_lea.sflag [#allocation5], 1
    %31 = vsyncpa %s30, 0
    loop: start=0, step=1, limit=4
    $region2: #{hkddnet_forward.1} parent=1 // loop_pre_header
      _
    $region3: #{hkddnet_forward.1} parent=1 // loop_header
      %s33 = sphi 0, %s37
      %p34 = scmp.ge.s32.totalorder %s33, 4
      %s40 = sphi 0, %s52
      %s41 = sphi 0, %s48
      %s42 = sphi 0, %s40
      %s43 = sphi 0, %s41
      %s44 = sphi 0, %s42
      %s45 = sphi 0, %s43
      %s57 = sphi 0, %s59
      %s60 = sphi 0, %s57
      %s61 = sphi 0, %s60
      %s77 = sphi 0, %s61
      %s81 = sphi 0, %s81
      %s83 = sphi 0, %s81
      %s84 = sphi 0, %s83
      %s98 = sphi 0, %s84
      %s102 = sphi 0, %s102
      %s104 = sphi 0, %s102
      %s105 = sphi 0, %s104
      %s119 = sphi 0, %s105
      %s123 = sphi 0, %s123
      %s125 = sphi 0, %s123
      %s126 = sphi 0, %s125
      %s140 = sphi 0, %s126
      %s144 = sphi 0, %s144
      %s146 = sphi 0, %s144
      %s147 = sphi 0, %s146
      %s161 = sphi 0, %s147
      %s165 = sphi 0, %s165
      %s167 = sphi 0, %s165
      %s168 = sphi 0, %s167
      %s182 = sphi 0, %s168
      %s186 = sphi 0, %s186
      %s188 = sphi 0, %s186
      %s189 = sphi 0, %s188
      %s203 = sphi 0, %s189
      %s209 = sphi 0, %s211
      %s212 = sphi 0, %s209
      %s213 = sphi 0, %s212
      %s229 = sphi 0, %s213
      %s233 = sphi 0, %s233
      %s235 = sphi 0, %s233
      %s236 = sphi 0, %s235
      %s250 = sphi 0, %s236
      %s254 = sphi 0, %s254
      %s256 = sphi 0, %s254
      %s257 = sphi 0, %s256
      %s271 = sphi 0, %s257
      %s275 = sphi 0, %s275
      %s277 = sphi 0, %s275
      %s278 = sphi 0, %s277
      %s292 = sphi 0, %s278
      %s296 = sphi 0, %s296
      %s298 = sphi 0, %s296
      %s299 = sphi 0, %s298
      %s313 = sphi 0, %s299
      %s317 = sphi 0, %s317
      %s319 = sphi 0, %s317
      %s320 = sphi 0, %s319
      %s334 = sphi 0, %s320
      %s338 = sphi 0, %s338
      %s340 = sphi 0, %s338
      %s341 = sphi 0, %s340
      %s355 = sphi 0, %s341
      %s359 = sphi 0, %s359
      %s361 = sphi 0, %s359
      %s362 = sphi 0, %s361
      %s376 = sphi 0, %s362
      %s380 = sphi 0, %s380
      %s382 = sphi 0, %s380
      %s383 = sphi 0, %s382
      %s397 = sphi 0, %s383
      %s401 = sphi 0, %s401
      %s403 = sphi 0, %s401
      %s404 = sphi 0, %s403
      %s418 = sphi 0, %s404
      %s422 = sphi 0, %s422
      %s424 = sphi 0, %s422
      %s425 = sphi 0, %s424
      %s439 = sphi 0, %s425
      %s443 = sphi 0, %s443
      %s445 = sphi 0, %s443
      %s446 = sphi 0, %s445
      %s460 = sphi 0, %s446
      %s464 = sphi 0, %s464
      %s466 = sphi 0, %s464
      %s467 = sphi 0, %s466
      %s481 = sphi 0, %s467
      %s485 = sphi 0, %s485
      %s487 = sphi 0, %s485
      %s488 = sphi 0, %s487
      %s502 = sphi 0, %s488
      %s506 = sphi 0, %s506
      %s508 = sphi 0, %s506
      %s509 = sphi 0, %s508
      %s523 = sphi 0, %s509
      %s529 = sphi 0, %s531
      %s532 = sphi 0, %s529
      %s533 = sphi 0, %s532
      %s549 = sphi 0, %s533
    $region4: #{hkddnet_forward.1} parent=1 // loop_header_branch
      %36 = sbr.rel (%p34) target = $region8
    $region5: #{hkddnet_forward.1} parent=1 // loop_body
      %s38 = ssub.s32 %s33, 1
      %s39 = ssub.s32 %s33, 2
      %s46 = sadd.s32 1, %s41
      %p47 = scmp.ge.s32.totalorder %s46, 1
      %s48 = scalar_select %p47, 0, %s46
      %s49 = sadd.s32 1, %s40
      %s50 = scalar_select %p47, %s49, %s40
      %p51 = scmp.ge.s32.totalorder %s50, 2
      %s52 = scalar_select %p51, 0, %s50
      %s53 = ssub.s32 %s40, %s52
      %s54 = ssub.s32 %s41, %s48
      %s55 = sor.u32 %s53, %s54
      %p56 = scmp.eq.s32.totalorder %s55, 0
      %s58 = sadd.s32 %s57, 1
      %s59 = scalar_select %p56, %s57, %s58
      %p62 = pneg %p56
      %p63 = scmp.eq.s32.totalorder %s33, 1
      %p64 = por %p62, %p63
      %p65 = scmp.ne.s32.totalorder %s57, %s60
      %p66 = scmp.eq.s32.totalorder %s33, 0
      %p67 = por %p65, %p66
      %p68 = scmp.ne.s32.totalorder %s57, %s60
      %p69 = scmp.eq.s32.totalorder %s38, 1
      %p70 = por %p68, %p69
      %p71 = scmp.ne.s32.totalorder %s60, %s61
      %p72 = scmp.eq.s32.totalorder %s38, 0
      %p73 = por %p71, %p72
      %p74 = scmp.ne.s32.totalorder %s60, %s61
      %p75 = scmp.eq.s32.totalorder %s39, 1
      %p76 = por %p74, %p75
      %p78 = scmp.ne.s32.totalorder %s61, %s77
      %p79 = scmp.eq.s32.totalorder %s39, 0
      %p80 = por %p78, %p79
      %s82 = sadd.s32 %s81, 1
      %p85 = scmp.eq.s32.totalorder %s33, 1
      %p86 = scmp.ne.s32.totalorder %s81, %s83
      %p87 = scmp.eq.s32.totalorder %s33, 0
      %p88 = por %p86, %p87
      %p89 = scmp.ne.s32.totalorder %s81, %s83
      %p90 = scmp.eq.s32.totalorder %s38, 1
      %p91 = por %p89, %p90
      %p92 = scmp.ne.s32.totalorder %s83, %s84
      %p93 = scmp.eq.s32.totalorder %s38, 0
      %p94 = por %p92, %p93
      %p95 = scmp.ne.s32.totalorder %s83, %s84
      %p96 = scmp.eq.s32.totalorder %s39, 1
      %p97 = por %p95, %p96
      %p99 = scmp.ne.s32.totalorder %s84, %s98
      %p100 = scmp.eq.s32.totalorder %s39, 0
      %p101 = por %p99, %p100
      %s103 = sadd.s32 %s102, 1
      %p106 = scmp.eq.s32.totalorder %s33, 1
      %p107 = scmp.ne.s32.totalorder %s102, %s104
      %p108 = scmp.eq.s32.totalorder %s33, 0
      %p109 = por %p107, %p108
      %p110 = scmp.ne.s32.totalorder %s102, %s104
      %p111 = scmp.eq.s32.totalorder %s38, 1
      %p112 = por %p110, %p111
      %p113 = scmp.ne.s32.totalorder %s104, %s105
      %p114 = scmp.eq.s32.totalorder %s38, 0
      %p115 = por %p113, %p114
      %p116 = scmp.ne.s32.totalorder %s104, %s105
      %p117 = scmp.eq.s32.totalorder %s39, 1
      %p118 = por %p116, %p117
      %p120 = scmp.ne.s32.totalorder %s105, %s119
      %p121 = scmp.eq.s32.totalorder %s39, 0
      %p122 = por %p120, %p121
      %s124 = sadd.s32 %s123, 1
      %p127 = scmp.eq.s32.totalorder %s33, 1
      %p128 = scmp.ne.s32.totalorder %s123, %s125
      %p129 = scmp.eq.s32.totalorder %s33, 0
      %p130 = por %p128, %p129
      %p131 = scmp.ne.s32.totalorder %s123, %s125
      %p132 = scmp.eq.s32.totalorder %s38, 1
      %p133 = por %p131, %p132
      %p134 = scmp.ne.s32.totalorder %s125, %s126
      %p135 = scmp.eq.s32.totalorder %s38, 0
      %p136 = por %p134, %p135
      %p137 = scmp.ne.s32.totalorder %s125, %s126
      %p138 = scmp.eq.s32.totalorder %s39, 1
      %p139 = por %p137, %p138
      %p141 = scmp.ne.s32.totalorder %s126, %s140
      %p142 = scmp.eq.s32.totalorder %s39, 0
      %p143 = por %p141, %p142
      %s145 = sadd.s32 %s144, 1
      %p148 = scmp.eq.s32.totalorder %s33, 1
      %p149 = scmp.ne.s32.totalorder %s144, %s146
      %p150 = scmp.eq.s32.totalorder %s33, 0
      %p151 = por %p149, %p150
      %p152 = scmp.ne.s32.totalorder %s144, %s146
      %p153 = scmp.eq.s32.totalorder %s38, 1
      %p154 = por %p152, %p153
      %p155 = scmp.ne.s32.totalorder %s146, %s147
      %p156 = scmp.eq.s32.totalorder %s38, 0
      %p157 = por %p155, %p156
      %p158 = scmp.ne.s32.totalorder %s146, %s147
      %p159 = scmp.eq.s32.totalorder %s39, 1
      %p160 = por %p158, %p159
      %p162 = scmp.ne.s32.totalorder %s147, %s161
      %p163 = scmp.eq.s32.totalorder %s39, 0
      %p164 = por %p162, %p163
      %s166 = sadd.s32 %s165, 1
      %p169 = scmp.eq.s32.totalorder %s33, 1
      %p170 = scmp.ne.s32.totalorder %s165, %s167
      %p171 = scmp.eq.s32.totalorder %s33, 0
      %p172 = por %p170, %p171
      %p173 = scmp.ne.s32.totalorder %s165, %s167
      %p174 = scmp.eq.s32.totalorder %s38, 1
      %p175 = por %p173, %p174
      %p176 = scmp.ne.s32.totalorder %s167, %s168
      %p177 = scmp.eq.s32.totalorder %s38, 0
      %p178 = por %p176, %p177
      %p179 = scmp.ne.s32.totalorder %s167, %s168
      %p180 = scmp.eq.s32.totalorder %s39, 1
      %p181 = por %p179, %p180
      %p183 = scmp.ne.s32.totalorder %s168, %s182
      %p184 = scmp.eq.s32.totalorder %s39, 0
      %p185 = por %p183, %p184
      %s187 = sadd.s32 %s186, 1
      %p190 = scmp.eq.s32.totalorder %s33, 1
      %p191 = scmp.ne.s32.totalorder %s186, %s188
      %p192 = scmp.eq.s32.totalorder %s33, 0
      %p193 = por %p191, %p192
      %p194 = scmp.ne.s32.totalorder %s186, %s188
      %p195 = scmp.eq.s32.totalorder %s38, 1
      %p196 = por %p194, %p195
      %p197 = scmp.ne.s32.totalorder %s188, %s189
      %p198 = scmp.eq.s32.totalorder %s38, 0
      %p199 = por %p197, %p198
      %p200 = scmp.ne.s32.totalorder %s188, %s189
      %p201 = scmp.eq.s32.totalorder %s39, 1
      %p202 = por %p200, %p201
      %p204 = scmp.ne.s32.totalorder %s189, %s203
      %p205 = scmp.eq.s32.totalorder %s39, 0
      %p206 = por %p204, %p205
      %s207 = ssub.s32 %s40, %s52
      %p208 = scmp.eq.s32.totalorder %s207, 0
      %s210 = sadd.s32 %s209, 1
      %s211 = scalar_select %p208, %s209, %s210
      %p214 = pneg %p208
      %p215 = scmp.eq.s32.totalorder %s33, 1
      %p216 = por %p214, %p215
      %p217 = scmp.ne.s32.totalorder %s209, %s212
      %p218 = scmp.eq.s32.totalorder %s33, 0
      %p219 = por %p217, %p218
      %p220 = scmp.ne.s32.totalorder %s209, %s212
      %p221 = scmp.eq.s32.totalorder %s38, 1
      %p222 = por %p220, %p221
      %p223 = scmp.ne.s32.totalorder %s212, %s213
      %p224 = scmp.eq.s32.totalorder %s38, 0
      %p225 = por %p223, %p224
      %p226 = scmp.ne.s32.totalorder %s212, %s213
      %p227 = scmp.eq.s32.totalorder %s39, 1
      %p228 = por %p226, %p227
      %p230 = scmp.ne.s32.totalorder %s213, %s229
      %p231 = scmp.eq.s32.totalorder %s39, 0
      %p232 = por %p230, %p231
      %s234 = sadd.s32 %s233, 1
      %p237 = scmp.eq.s32.totalorder %s33, 1
      %p238 = scmp.ne.s32.totalorder %s233, %s235
      %p239 = scmp.eq.s32.totalorder %s33, 0
      %p240 = por %p238, %p239
      %p241 = scmp.ne.s32.totalorder %s233, %s235
      %p242 = scmp.eq.s32.totalorder %s38, 1
      %p243 = por %p241, %p242
      %p244 = scmp.ne.s32.totalorder %s235, %s236
      %p245 = scmp.eq.s32.totalorder %s38, 0
      %p246 = por %p244, %p245
      %p247 = scmp.ne.s32.totalorder %s235, %s236
      %p248 = scmp.eq.s32.totalorder %s39, 1
      %p249 = por %p247, %p248
      %p251 = scmp.ne.s32.totalorder %s236, %s250
      %p252 = scmp.eq.s32.totalorder %s39, 0
      %p253 = por %p251, %p252
      %s255 = sadd.s32 %s254, 1
      %p258 = scmp.eq.s32.totalorder %s33, 1
      %p259 = scmp.ne.s32.totalorder %s254, %s256
      %p260 = scmp.eq.s32.totalorder %s33, 0
      %p261 = por %p259, %p260
      %p262 = scmp.ne.s32.totalorder %s254, %s256
      %p263 = scmp.eq.s32.totalorder %s38, 1
      %p264 = por %p262, %p263
      %p265 = scmp.ne.s32.totalorder %s256, %s257
      %p266 = scmp.eq.s32.totalorder %s38, 0
      %p267 = por %p265, %p266
      %p268 = scmp.ne.s32.totalorder %s256, %s257
      %p269 = scmp.eq.s32.totalorder %s39, 1
      %p270 = por %p268, %p269
      %p272 = scmp.ne.s32.totalorder %s257, %s271
      %p273 = scmp.eq.s32.totalorder %s39, 0
      %p274 = por %p272, %p273
      %s276 = sadd.s32 %s275, 1
      %p279 = scmp.eq.s32.totalorder %s33, 1
      %p280 = scmp.ne.s32.totalorder %s275, %s277
      %p281 = scmp.eq.s32.totalorder %s33, 0
      %p282 = por %p280, %p281
      %p283 = scmp.ne.s32.totalorder %s275, %s277
      %p284 = scmp.eq.s32.totalorder %s38, 1
      %p285 = por %p283, %p284
      %p286 = scmp.ne.s32.totalorder %s277, %s278
      %p287 = scmp.eq.s32.totalorder %s38, 0
      %p288 = por %p286, %p287
      %p289 = scmp.ne.s32.totalorder %s277, %s278
      %p290 = scmp.eq.s32.totalorder %s39, 1
      %p291 = por %p289, %p290
      %p293 = scmp.ne.s32.totalorder %s278, %s292
      %p294 = scmp.eq.s32.totalorder %s39, 0
      %p295 = por %p293, %p294
      %s297 = sadd.s32 %s296, 1
      %p300 = scmp.eq.s32.totalorder %s33, 1
      %p301 = scmp.ne.s32.totalorder %s296, %s298
      %p302 = scmp.eq.s32.totalorder %s33, 0
      %p303 = por %p301, %p302
      %p304 = scmp.ne.s32.totalorder %s296, %s298
      %p305 = scmp.eq.s32.totalorder %s38, 1
      %p306 = por %p304, %p305
      %p307 = scmp.ne.s32.totalorder %s298, %s299
      %p308 = scmp.eq.s32.totalorder %s38, 0
      %p309 = por %p307, %p308
      %p310 = scmp.ne.s32.totalorder %s298, %s299
      %p311 = scmp.eq.s32.totalorder %s39, 1
      %p312 = por %p310, %p311
      %p314 = scmp.ne.s32.totalorder %s299, %s313
      %p315 = scmp.eq.s32.totalorder %s39, 0
      %p316 = por %p314, %p315
      %s318 = sadd.s32 %s317, 1
      %p321 = scmp.eq.s32.totalorder %s33, 1
      %p322 = scmp.ne.s32.totalorder %s317, %s319
      %p323 = scmp.eq.s32.totalorder %s33, 0
      %p324 = por %p322, %p323
      %p325 = scmp.ne.s32.totalorder %s317, %s319
      %p326 = scmp.eq.s32.totalorder %s38, 1
      %p327 = por %p325, %p326
      %p328 = scmp.ne.s32.totalorder %s319, %s320
      %p329 = scmp.eq.s32.totalorder %s38, 0
      %p330 = por %p328, %p329
      %p331 = scmp.ne.s32.totalorder %s319, %s320
      %p332 = scmp.eq.s32.totalorder %s39, 1
      %p333 = por %p331, %p332
      %p335 = scmp.ne.s32.totalorder %s320, %s334
      %p336 = scmp.eq.s32.totalorder %s39, 0
      %p337 = por %p335, %p336
      %s339 = sadd.s32 %s338, 1
      %p342 = scmp.eq.s32.totalorder %s33, 1
      %p343 = scmp.ne.s32.totalorder %s338, %s340
      %p344 = scmp.eq.s32.totalorder %s33, 0
      %p345 = por %p343, %p344
      %p346 = scmp.ne.s32.totalorder %s338, %s340
      %p347 = scmp.eq.s32.totalorder %s38, 1
      %p348 = por %p346, %p347
      %p349 = scmp.ne.s32.totalorder %s340, %s341
      %p350 = scmp.eq.s32.totalorder %s38, 0
      %p351 = por %p349, %p350
      %p352 = scmp.ne.s32.totalorder %s340, %s341
      %p353 = scmp.eq.s32.totalorder %s39, 1
      %p354 = por %p352, %p353
      %p356 = scmp.ne.s32.totalorder %s341, %s355
      %p357 = scmp.eq.s32.totalorder %s39, 0
      %p358 = por %p356, %p357
      %s360 = sadd.s32 %s359, 1
      %p363 = scmp.eq.s32.totalorder %s33, 1
      %p364 = scmp.ne.s32.totalorder %s359, %s361
      %p365 = scmp.eq.s32.totalorder %s33, 0
      %p366 = por %p364, %p365
      %p367 = scmp.ne.s32.totalorder %s359, %s361
      %p368 = scmp.eq.s32.totalorder %s38, 1
      %p369 = por %p367, %p368
      %p370 = scmp.ne.s32.totalorder %s361, %s362
      %p371 = scmp.eq.s32.totalorder %s38, 0
      %p372 = por %p370, %p371
      %p373 = scmp.ne.s32.totalorder %s361, %s362
      %p374 = scmp.eq.s32.totalorder %s39, 1
      %p375 = por %p373, %p374
      %p377 = scmp.ne.s32.totalorder %s362, %s376
      %p378 = scmp.eq.s32.totalorder %s39, 0
      %p379 = por %p377, %p378
      %s381 = sadd.s32 %s380, 1
      %p384 = scmp.eq.s32.totalorder %s33, 1
      %p385 = scmp.ne.s32.totalorder %s380, %s382
      %p386 = scmp.eq.s32.totalorder %s33, 0
      %p387 = por %p385, %p386
      %p388 = scmp.ne.s32.totalorder %s380, %s382
      %p389 = scmp.eq.s32.totalorder %s38, 1
      %p390 = por %p388, %p389
      %p391 = scmp.ne.s32.totalorder %s382, %s383
      %p392 = scmp.eq.s32.totalorder %s38, 0
      %p393 = por %p391, %p392
      %p394 = scmp.ne.s32.totalorder %s382, %s383
      %p395 = scmp.eq.s32.totalorder %s39, 1
      %p396 = por %p394, %p395
      %p398 = scmp.ne.s32.totalorder %s383, %s397
      %p399 = scmp.eq.s32.totalorder %s39, 0
      %p400 = por %p398, %p399
      %s402 = sadd.s32 %s401, 1
      %p405 = scmp.eq.s32.totalorder %s33, 1
      %p406 = scmp.ne.s32.totalorder %s401, %s403
      %p407 = scmp.eq.s32.totalorder %s33, 0
      %p408 = por %p406, %p407
      %p409 = scmp.ne.s32.totalorder %s401, %s403
      %p410 = scmp.eq.s32.totalorder %s38, 1
      %p411 = por %p409, %p410
      %p412 = scmp.ne.s32.totalorder %s403, %s404
      %p413 = scmp.eq.s32.totalorder %s38, 0
      %p414 = por %p412, %p413
      %p415 = scmp.ne.s32.totalorder %s403, %s404
      %p416 = scmp.eq.s32.totalorder %s39, 1
      %p417 = por %p415, %p416
      %p419 = scmp.ne.s32.totalorder %s404, %s418
      %p420 = scmp.eq.s32.totalorder %s39, 0
      %p421 = por %p419, %p420
      %s423 = sadd.s32 %s422, 1
      %p426 = scmp.eq.s32.totalorder %s33, 1
      %p427 = scmp.ne.s32.totalorder %s422, %s424
      %p428 = scmp.eq.s32.totalorder %s33, 0
      %p429 = por %p427, %p428
      %p430 = scmp.ne.s32.totalorder %s422, %s424
      %p431 = scmp.eq.s32.totalorder %s38, 1
      %p432 = por %p430, %p431
      %p433 = scmp.ne.s32.totalorder %s424, %s425
      %p434 = scmp.eq.s32.totalorder %s38, 0
      %p435 = por %p433, %p434
      %p436 = scmp.ne.s32.totalorder %s424, %s425
      %p437 = scmp.eq.s32.totalorder %s39, 1
      %p438 = por %p436, %p437
      %p440 = scmp.ne.s32.totalorder %s425, %s439
      %p441 = scmp.eq.s32.totalorder %s39, 0
      %p442 = por %p440, %p441
      %s444 = sadd.s32 %s443, 1
      %p447 = scmp.eq.s32.totalorder %s33, 1
      %p448 = scmp.ne.s32.totalorder %s443, %s445
      %p449 = scmp.eq.s32.totalorder %s33, 0
      %p450 = por %p448, %p449
      %p451 = scmp.ne.s32.totalorder %s443, %s445
      %p452 = scmp.eq.s32.totalorder %s38, 1
      %p453 = por %p451, %p452
      %p454 = scmp.ne.s32.totalorder %s445, %s446
      %p455 = scmp.eq.s32.totalorder %s38, 0
      %p456 = por %p454, %p455
      %p457 = scmp.ne.s32.totalorder %s445, %s446
      %p458 = scmp.eq.s32.totalorder %s39, 1
      %p459 = por %p457, %p458
      %p461 = scmp.ne.s32.totalorder %s446, %s460
      %p462 = scmp.eq.s32.totalorder %s39, 0
      %p463 = por %p461, %p462
      %s465 = sadd.s32 %s464, 1
      %p468 = scmp.eq.s32.totalorder %s33, 1
      %p469 = scmp.ne.s32.totalorder %s464, %s466
      %p470 = scmp.eq.s32.totalorder %s33, 0
      %p471 = por %p469, %p470
      %p472 = scmp.ne.s32.totalorder %s464, %s466
      %p473 = scmp.eq.s32.totalorder %s38, 1
      %p474 = por %p472, %p473
      %p475 = scmp.ne.s32.totalorder %s466, %s467
      %p476 = scmp.eq.s32.totalorder %s38, 0
      %p477 = por %p475, %p476
      %p478 = scmp.ne.s32.totalorder %s466, %s467
      %p479 = scmp.eq.s32.totalorder %s39, 1
      %p480 = por %p478, %p479
      %p482 = scmp.ne.s32.totalorder %s467, %s481
      %p483 = scmp.eq.s32.totalorder %s39, 0
      %p484 = por %p482, %p483
      %s486 = sadd.s32 %s485, 1
      %p489 = scmp.eq.s32.totalorder %s33, 1
      %p490 = scmp.ne.s32.totalorder %s485, %s487
      %p491 = scmp.eq.s32.totalorder %s33, 0
      %p492 = por %p490, %p491
      %p493 = scmp.ne.s32.totalorder %s485, %s487
      %p494 = scmp.eq.s32.totalorder %s38, 1
      %p495 = por %p493, %p494
      %p496 = scmp.ne.s32.totalorder %s487, %s488
      %p497 = scmp.eq.s32.totalorder %s38, 0
      %p498 = por %p496, %p497
      %p499 = scmp.ne.s32.totalorder %s487, %s488
      %p500 = scmp.eq.s32.totalorder %s39, 1
      %p501 = por %p499, %p500
      %p503 = scmp.ne.s32.totalorder %s488, %s502
      %p504 = scmp.eq.s32.totalorder %s39, 0
      %p505 = por %p503, %p504
      %s507 = sadd.s32 %s506, 1
      %p510 = scmp.eq.s32.totalorder %s33, 1
      %p511 = scmp.ne.s32.totalorder %s506, %s508
      %p512 = scmp.eq.s32.totalorder %s33, 0
      %p513 = por %p511, %p512
      %p514 = scmp.ne.s32.totalorder %s506, %s508
      %p515 = scmp.eq.s32.totalorder %s38, 1
      %p516 = por %p514, %p515
      %p517 = scmp.ne.s32.totalorder %s508, %s509
      %p518 = scmp.eq.s32.totalorder %s38, 0
      %p519 = por %p517, %p518
      %p520 = scmp.ne.s32.totalorder %s508, %s509
      %p521 = scmp.eq.s32.totalorder %s39, 1
      %p522 = por %p520, %p521
      %p524 = scmp.ne.s32.totalorder %s509, %s523
      %p525 = scmp.eq.s32.totalorder %s39, 0
      %p526 = por %p524, %p525
      %s527 = ssub.s32 %s40, %s52
      %p528 = scmp.eq.s32.totalorder %s527, 0
      %s530 = sadd.s32 %s529, 1
      %s531 = scalar_select %p528, %s529, %s530
      %p534 = pneg %p528
      %p535 = scmp.eq.s32.totalorder %s33, 1
      %p536 = por %p534, %p535
      %p537 = scmp.ne.s32.totalorder %s529, %s532
      %p538 = scmp.eq.s32.totalorder %s33, 0
      %p539 = por %p537, %p538
      %p540 = scmp.ne.s32.totalorder %s529, %s532
      %p541 = scmp.eq.s32.totalorder %s38, 1
      %p542 = por %p540, %p541
      %p543 = scmp.ne.s32.totalorder %s532, %s533
      %p544 = scmp.eq.s32.totalorder %s38, 0
      %p545 = por %p543, %p544
      %p546 = scmp.ne.s32.totalorder %s532, %s533
      %p547 = scmp.eq.s32.totalorder %s39, 1
      %p548 = por %p546, %p547
      %p550 = scmp.ne.s32.totalorder %s533, %s549
      %p551 = scmp.eq.s32.totalorder %s39, 0
      %p552 = por %p550, %p551
      %p553 = scmp.le.s32.totalorder 1, %s33
      %p554 = scmp.lt.s32.totalorder %s33, 3
      %p555 = pnand %p553, %p554
      %p556 = pneg %p555
      // Predicated region
      $region9: #{hkddnet_forward.1} parent=5 // pred_check
        _
      $region10: #{hkddnet_forward.1} parent=5 // pred_check_branch
        %558 = sbr.rel (%p555) target = $region12
      $region11: #{hkddnet_forward.1} parent=5 // pred_region
        %s559 = ssub.s32 %s33, 1
        // Predicated region
        $region13: #{hkddnet_forward.1} parent=11 // pred_check
          %p560 = pneg %p94
        $region14: #{hkddnet_forward.1} parent=11 // pred_check_branch
          %562 = sbr.rel (%p560) target = $region16
        $region15: #{hkddnet_forward.1} parent=11 // pred_region
          _
        $region16: #{hkddnet_forward.1} parent=11 // pred_fallthru
          _
        // Predicated region
        $region17: #{hkddnet_forward.1} parent=11 // pred_check
          %p563 = pneg %p115
        $region18: #{hkddnet_forward.1} parent=11 // pred_check_branch
          %565 = sbr.rel (%p563) target = $region20
        $region19: #{hkddnet_forward.1} parent=11 // pred_region
          _
        $region20: #{hkddnet_forward.1} parent=11 // pred_fallthru
          _
        // Predicated region
        $region21: #{hkddnet_forward.1} parent=11 // pred_check
          %p566 = pneg %p136
        $region22: #{hkddnet_forward.1} parent=11 // pred_check_branch
          %568 = sbr.rel (%p566) target = $region24
        $region23: #{hkddnet_forward.1} parent=11 // pred_region
          _
        $region24: #{hkddnet_forward.1} parent=11 // pred_fallthru
          _
        // Predicated region
        $region25: #{hkddnet_forward.1} parent=11 // pred_check
          %p569 = pneg %p157
        $region26: #{hkddnet_forward.1} parent=11 // pred_check_branch
          %571 = sbr.rel (%p569) target = $region28
        $region27: #{hkddnet_forward.1} parent=11 // pred_region
          _
        $region28: #{hkddnet_forward.1} parent=11 // pred_fallthru
          _
        // Predicated region
        $region29: #{hkddnet_forward.1} parent=11 // pred_check
          %p572 = pneg %p178
        $region30: #{hkddnet_forward.1} parent=11 // pred_check_branch
          %574 = sbr.rel (%p572) target = $region32
        $region31: #{hkddnet_forward.1} parent=11 // pred_region
          _
        $region32: #{hkddnet_forward.1} parent=11 // pred_fallthru
          _
        // Predicated region
        $region33: #{hkddnet_forward.1} parent=11 // pred_check
          %p575 = pneg %p199
        $region34: #{hkddnet_forward.1} parent=11 // pred_check_branch
          %577 = sbr.rel (%p575) target = $region36
        $region35: #{hkddnet_forward.1} parent=11 // pred_region
          _
        $region36: #{hkddnet_forward.1} parent=11 // pred_fallthru
          _
        // Predicated region
        $region37: #{hkddnet_forward.1} parent=11 // pred_check
          %p578 = pneg %p246
        $region38: #{hkddnet_forward.1} parent=11 // pred_check_branch
          %580 = sbr.rel (%p578) target = $region40
        $region39: #{hkddnet_forward.1} parent=11 // pred_region
          _
        $region40: #{hkddnet_forward.1} parent=11 // pred_fallthru
          _
        // Predicated region
        $region41: #{hkddnet_forward.1} parent=11 // pred_check
          %p581 = pneg %p267
        $region42: #{hkddnet_forward.1} parent=11 // pred_check_branch
          %583 = sbr.rel (%p581) target = $region44
        $region43: #{hkddnet_forward.1} parent=11 // pred_region
          _
        $region44: #{hkddnet_forward.1} parent=11 // pred_fallthru
          _
        // Predicated region
        $region45: #{hkddnet_forward.1} parent=11 // pred_check
          %p584 = pneg %p288
        $region46: #{hkddnet_forward.1} parent=11 // pred_check_branch
          %586 = sbr.rel (%p584) target = $region48
        $region47: #{hkddnet_forward.1} parent=11 // pred_region
          _
        $region48: #{hkddnet_forward.1} parent=11 // pred_fallthru
          _
        // Predicated region
        $region49: #{hkddnet_forward.1} parent=11 // pred_check
          %p587 = pneg %p309
        $region50: #{hkddnet_forward.1} parent=11 // pred_check_branch
          %589 = sbr.rel (%p587) target = $region52
        $region51: #{hkddnet_forward.1} parent=11 // pred_region
          _
        $region52: #{hkddnet_forward.1} parent=11 // pred_fallthru
          _
        // Predicated region
        $region53: #{hkddnet_forward.1} parent=11 // pred_check
          %p590 = pneg %p330
        $region54: #{hkddnet_forward.1} parent=11 // pred_check_branch
          %592 = sbr.rel (%p590) target = $region56
        $region55: #{hkddnet_forward.1} parent=11 // pred_region
          _
        $region56: #{hkddnet_forward.1} parent=11 // pred_fallthru
          _
        // Predicated region
        $region57: #{hkddnet_forward.1} parent=11 // pred_check
          %p593 = pneg %p351
        $region58: #{hkddnet_forward.1} parent=11 // pred_check_branch
          %595 = sbr.rel (%p593) target = $region60
        $region59: #{hkddnet_forward.1} parent=11 // pred_region
          _
        $region60: #{hkddnet_forward.1} parent=11 // pred_fallthru
          _
        // Predicated region
        $region61: #{hkddnet_forward.1} parent=11 // pred_check
          %p596 = pneg %p372
        $region62: #{hkddnet_forward.1} parent=11 // pred_check_branch
          %598 = sbr.rel (%p596) target = $region64
        $region63: #{hkddnet_forward.1} parent=11 // pred_region
          _
        $region64: #{hkddnet_forward.1} parent=11 // pred_fallthru
          _
        // Predicated region
        $region65: #{hkddnet_forward.1} parent=11 // pred_check
          %p599 = pneg %p393
        $region66: #{hkddnet_forward.1} parent=11 // pred_check_branch
          %601 = sbr.rel (%p599) target = $region68
        $region67: #{hkddnet_forward.1} parent=11 // pred_region
          _
        $region68: #{hkddnet_forward.1} parent=11 // pred_fallthru
          _
        // Predicated region
        $region69: #{hkddnet_forward.1} parent=11 // pred_check
          %p602 = pneg %p414
        $region70: #{hkddnet_forward.1} parent=11 // pred_check_branch
          %604 = sbr.rel (%p602) target = $region72
        $region71: #{hkddnet_forward.1} parent=11 // pred_region
          _
        $region72: #{hkddnet_forward.1} parent=11 // pred_fallthru
          _
        // Predicated region
        $region73: #{hkddnet_forward.1} parent=11 // pred_check
          %p605 = pneg %p435
        $region74: #{hkddnet_forward.1} parent=11 // pred_check_branch
          %607 = sbr.rel (%p605) target = $region76
        $region75: #{hkddnet_forward.1} parent=11 // pred_region
          _
        $region76: #{hkddnet_forward.1} parent=11 // pred_fallthru
          _
        // Predicated region
        $region77: #{hkddnet_forward.1} parent=11 // pred_check
          %p608 = pneg %p456
        $region78: #{hkddnet_forward.1} parent=11 // pred_check_branch
          %610 = sbr.rel (%p608) target = $region80
        $region79: #{hkddnet_forward.1} parent=11 // pred_region
          _
        $region80: #{hkddnet_forward.1} parent=11 // pred_fallthru
          _
        // Predicated region
        $region81: #{hkddnet_forward.1} parent=11 // pred_check
          %p611 = pneg %p477
        $region82: #{hkddnet_forward.1} parent=11 // pred_check_branch
          %613 = sbr.rel (%p611) target = $region84
        $region83: #{hkddnet_forward.1} parent=11 // pred_region
          _
        $region84: #{hkddnet_forward.1} parent=11 // pred_fallthru
          _
        // Predicated region
        $region85: #{hkddnet_forward.1} parent=11 // pred_check
          %p614 = pneg %p498
        $region86: #{hkddnet_forward.1} parent=11 // pred_check_branch
          %616 = sbr.rel (%p614) target = $region88
        $region87: #{hkddnet_forward.1} parent=11 // pred_region
          _
        $region88: #{hkddnet_forward.1} parent=11 // pred_fallthru
          _
        // Predicated region
        $region89: #{hkddnet_forward.1} parent=11 // pred_check
          %p617 = pneg %p519
        $region90: #{hkddnet_forward.1} parent=11 // pred_check_branch
          %619 = sbr.rel (%p617) target = $region92
        $region91: #{hkddnet_forward.1} parent=11 // pred_region
          _
        $region92: #{hkddnet_forward.1} parent=11 // pred_fallthru
          _
      $region12: #{hkddnet_forward.1} parent=5 // pred_fallthru
        _
      %p620 = scmp.lt.s32.totalorder %s33, 2
      // Predicated region
      $region93: #{hkddnet_forward.1} parent=5 // pred_check
        %p621 = pneg %p620
      $region94: #{hkddnet_forward.1} parent=5 // pred_check_branch
        %623 = sbr.rel (%p621) target = $region96
      $region95: #{hkddnet_forward.1} parent=5 // pred_region
        // Predicated region
        $region97: #{hkddnet_forward.1} parent=95 // pred_check
          %p624 = pneg %p67
        $region98: #{hkddnet_forward.1} parent=95 // pred_check_branch
          %626 = sbr.rel (%p624) target = $region100
        $region99: #{hkddnet_forward.1} parent=95 // pred_region
          %p627 = scmp.lt.s32.totalorder %s40, 1
          %s628 = scalar_select %p627, %s40, 1
          %p629 = scmp.lt.s32.totalorder %s41, 0
          %s630 = scalar_select %p629, %s41, 0
          %s631 = smul.addr %s630, 3
          %s632 = smul.addr %s628, 3
          %s633 = sadd.s32 %s631, %s632
          %s634 = smul.addr %s633, 4
          %s635 = scalar_lea.vmem %s0, %s634
        $region100: #{hkddnet_forward.1} parent=95 // pred_fallthru
          _
        // Predicated region
        $region101: #{hkddnet_forward.1} parent=95 // pred_check
          %p636 = pneg %p219
        $region102: #{hkddnet_forward.1} parent=95 // pred_check_branch
          %638 = sbr.rel (%p636) target = $region104
        $region103: #{hkddnet_forward.1} parent=95 // pred_region
          %p639 = scmp.lt.s32.totalorder %s40, 1
          %s640 = scalar_select %p639, %s40, 1
          %s641 = scalar_lea.vmem %s7, %s640
        $region104: #{hkddnet_forward.1} parent=95 // pred_fallthru
          _
      $region96: #{hkddnet_forward.1} parent=5 // pred_fallthru
        _
      %p642 = scmp.le.s32.totalorder 1, %s33
      %p643 = scmp.lt.s32.totalorder %s33, 3
      %p644 = pnand %p642, %p643
      %p645 = pneg %p644
      // Predicated region
      $region105: #{hkddnet_forward.1} parent=5 // pred_check
        _
      $region106: #{hkddnet_forward.1} parent=5 // pred_check_branch
        %647 = sbr.rel (%p644) target = $region108
      $region107: #{hkddnet_forward.1} parent=5 // pred_region
        %s648 = ssub.s32 %s33, 1
        %p649 = scmp.lt.s32.totalorder %s42, 1
        %s650 = scalar_select %p649, %s42, 1
        %p651 = scmp.lt.s32.totalorder %s43, 0
        %s652 = scalar_select %p651, %s43, 0
        %s653 = smul.addr %s652, 3
        %s654 = smul.addr %s650, 3
        %s655 = sadd.s32 %s653, %s654
        %s656 = smul.addr %s655, 4
        %s657 = scalar_lea.vmem %s0, %s656
        %p658 = pneg %p73
        %p659 = pneg %p70
        %p660 = pneg %p94
        %p661 = pneg %p91
        %p662 = pneg %p115
        %p663 = pneg %p112
        %p664 = pneg %p136
        %p665 = pneg %p133
        %p666 = pneg %p157
        %p667 = pneg %p154
        %p668 = pneg %p178
        %p669 = pneg %p175
        %p670 = pneg %p199
        %p671 = pneg %p196
        %p672 = scmp.lt.s32.totalorder %s42, 1
        %s673 = scalar_select %p672, %s42, 1
        %s674 = scalar_lea.vmem %s7, %s673
        %p675 = pneg %p225
        %p676 = pneg %p222
        %p677 = pneg %p246
        %p678 = pneg %p243
        %p679 = pneg %p267
        %p680 = pneg %p264
        %p681 = pneg %p288
        %p682 = pneg %p285
        %p683 = pneg %p309
        %p684 = pneg %p306
        %p685 = pneg %p330
        %p686 = pneg %p327
        %p687 = pneg %p351
        %p688 = pneg %p348
        %p689 = pneg %p372
        %p690 = pneg %p369
        %p691 = pneg %p393
        %p692 = pneg %p390
        %p693 = pneg %p414
        %p694 = pneg %p411
        %p695 = pneg %p435
        %p696 = pneg %p432
        %p697 = pneg %p456
        %p698 = pneg %p453
        %p699 = pneg %p477
        %p700 = pneg %p474
        %p701 = pneg %p498
        %p702 = pneg %p495
        %p703 = pneg %p519
        %p704 = pneg %p516
        %p705 = pneg %p545
        %p706 = pneg %p542
        %s707 = sand.u32 %s532, 1
        %s708 = scalar_lea.sflag [#allocation5], %s707
        %s709 = sand.u32 %s532, 1
        %s710 = scalar_lea.vmem [#allocation4], %s709
        %p711 = scmp.lt.s32.totalorder %s42, 1
        %s712 = scalar_select %p711, %s42, 1
        %p713 = scmp.lt.s32.totalorder %s43, 0
        %s714 = scalar_select %p713, %s43, 0
        %s715 = smul.addr %s714, 3
        %s716 = smul.addr %s712, 3
        %s717 = sadd.s32 %s715, %s716
        %s718 = smul.addr %s717, 4
        %s719 = scalar_lea.vmem %s0, %s718
        %p720 = scmp.lt.s32.totalorder %s42, 1
        %s721 = scalar_select %p720, %s42, 1
        %s722 = scalar_lea.vmem %s7, %s721
        %s726 = smul.u32 %s43, 16
        %p727 = scmp.eq.s32.totalorder %s43, 0
        %p728 = scmp.ge.s32.totalorder %s43, 4294967295
        %p729 = por %p727, %p728
        %v730 = vld [vmem:[%s719] sm:$0xf]
        %v731 = vld [vmem:[%s719 + $0x4] sm:$0xf]
        %v732 = vld [vmem:[%s719 + $0x8] sm:$0x3]
        %v733 = vld [vmem:[%s1] sm:$0x7]
        %v734 = vld [vmem:[%s2] sm:$0x1]
        %v736 = vlaneseq
        %v737 = vshrl.u32 %v736, 7
        %v738 = vsub.s32 0, %v737
        %v739 = vrot.slane %v734, %v738
        %v744 = vunpack.c.l.b16 %v730
        %v745 = vunpack.c.l.b16 %v731
        %v746 = vunpack.c.l.b16 %v732
        %v747 = vpack.c.b16 %v745, %v744
        %v748 = vpack.c.b16 %v746, %v746
        %vm749 = vcmask 48128
        %v751 = vsel %vm749, %v747, 0
        %v754 = vsel %vm749, %v748, 0
        %vm756 = vcmask 1042432
        %v758 = vsel %vm756, %v733, 0
        %760 = vmatprep.subr.bf16.mxu0 0
        %761 = vmatpush1.bf16.msra.mxu0 %v758
        %762 = vmatprep.subr.bf16.mxu0 0
        %763 = vmatpush1.bf16.msra.mxu0 0
        %764 = vmatprep.subr.bf16.mxu0 0
        %765 = vmatpush1.bf16.msra.mxu0 0
        %766 = vmatprep.subr.bf16.mxu0 0
        %767 = vmatpush1.bf16.msra.mxu0 0
        %768 = vmatprep.subr.bf16.mxu0 0
        %769 = vmatpush1.bf16.msra.mxu0 0
        %770 = vmatprep.subr.bf16.mxu0 0
        %771 = vmatpush1.bf16.msra.mxu0 0
        %772 = vmatprep.subr.bf16.mxu0 0
        %773 = vmatpush1.bf16.msra.mxu0 0
        %774 = vmatprep.subr.bf16.mxu0 0
        %775 = vmatpush1.bf16.msra.mxu0 0
        %776 = vmatprep.subr.bf16.mxu0 0
        %777 = vmatpush1.bf16.msra.mxu0 0
        %778 = vmatprep.subr.bf16.mxu0 0
        %779 = vmatpush1.bf16.msra.mxu0 0
        %780 = vmatprep.subr.bf16.mxu0 0
        %781 = vmatpush1.bf16.msra.mxu0 0
        %782 = vmatprep.subr.bf16.mxu0 0
        %783 = vmatpush1.bf16.msra.mxu0 0
        %784 = vmatprep.subr.bf16.mxu0 0
        %785 = vmatpush1.bf16.msra.mxu0 0
        %786 = vmatprep.subr.bf16.mxu0 0
        %787 = vmatpush1.bf16.msra.mxu0 0
        %788 = vmatprep.subr.bf16.mxu0 0
        %789 = vmatpush1.bf16.msra.mxu0 0
        %790 = vmatprep.subr.bf16.mxu0 0
        %791 = vmatpush1.bf16.msra.mxu0 0
        %792 = vmatprep.mubr.bf16.mxu0 0
        %793 = vmatmul.mubr.bf16.gmra.mrb[0].mxu0 %v751
        %v794 = vpop.f32.mrb[0].mxu0
        %v795 = vadd.f32 %v739, %v794
        %v796 = vpop.f32.mrb[0].mxu0
        %v797 = vpop.f32.mrb[0].mxu0
        %v798 = vadd.f32 %v739, %v797
        %v799 = vpop.f32.mrb[0].mxu0
        %800 = vmatprep.mubr.bf16.mxu0 0
        %801 = vmatmul.mubr.bf16.gmra.mrb[0].mxu0 %v754
        %v802 = vpop.f32.mrb[0].mxu0
        %v803 = vadd.f32 %v739, %v802
        %v804 = vpop.f32.mrb[0].mxu0
        %v805 = vpop.f32.mrb[0].mxu0
        %v806 = vpop.f32.mrb[0].mxu0
        %807 = vdwg.mxu0
        %v808 = vmax.f32 %v795, 0.0
        %v809 = vmax.f32 %v798, 0.0
        %v810 = vmax.f32 %v803, 0.0
        %v811 = vpack.c.bf16 %v809, %v808
        %v812 = vpack.c.bf16 %v810, %v810
        %s813 = ssub.s32 %s726, 2
        // Predicated region
        $region109: #{hkddnet_forward.1} parent=107 // pred_check
          %p814 = pneg %p729
        $region110: #{hkddnet_forward.1} parent=107 // pred_check_branch
          %816 = sbr.rel (%p814) target = $region112
        $region111: #{hkddnet_forward.1} parent=107 // pred_region
          %v817 = vlaneseq
          %v818 = vshrl.u32 %v817, 7
          %v819 = vadd.s32 %v818, 8
          %v820 = vadd.s32 %v818, 16
          %v821 = vstv %s813
          %v822 = vadd.s32 %v821, %v818
          %v823 = vadd.s32 %v821, %v819
          %v824 = vadd.s32 %v821, %v820
          %vm825 = vcmp.ge.s32.totalorder %v822, 0
          %vm826 = vcmp.ge.s32.totalorder %v823, 0
          %vm827 = vcmp.ge.s32.totalorder %v824, 0
          %vm828 = vcmp.lt.s32.totalorder %v822, 16
          %vm829 = vcmp.lt.s32.totalorder %v823, 16
          %vm830 = vcmp.lt.s32.totalorder %v824, 16
          %vm831 = vmand %vm825, %vm828
          %vm832 = vmand %vm826, %vm829
          %vm833 = vmand %vm827, %vm830
          %v834 = vsel %vm831, 1, 0
          %v835 = vsel %vm832, 1, 0
          %v836 = vsel %vm833, 1, 0
          %vm837 = vcmp.eq.s32.totalorder %v834, 1
          %vm838 = vcmp.eq.s32.totalorder %v835, 1
          %vm839 = vcmp.eq.s32.totalorder %v836, 1
          %vm840 = vmpackc.low %vm837, %vm837
          %vm841 = vmpackc.low %vm838, %vm838
          %vm842 = vmpackc.low %vm839, %vm839
          %v843 = vsel %vm840, 65537, 0
          %v844 = vsel %vm841, 65537, 0
          %v845 = vsel %vm842, 65537, 0
          %v846 = vunpack.c.l.b16 %v843
          %v847 = vunpack.c.l.b16 %v844
          %v848 = vunpack.c.l.b16 %v845
          %v849 = vpack.c.b16 %v847, %v846
          %v850 = vpack.c.b16 %v848, %v848
          %vm851 = vcmp.ne.s16.totalorder %v849, 0
          %vm852 = vcmp.ne.s16.totalorder %v850, 0
          %v853 = vsel %vm851, %v811, 0
          %v854 = vsel %vm852, %v812, 0
        $region112: #{hkddnet_forward.1} parent=107 // pred_fallthru
          %v855 = vphi 0, %v853
          %v856 = vphi 0, %v854
        %p857 = pneg %p729
        // Predicated region
        $region113: #{hkddnet_forward.1} parent=107 // pred_check
          _
        $region114: #{hkddnet_forward.1} parent=107 // pred_check_branch
          %859 = sbr.rel (%p729) target = $region116
        $region115: #{hkddnet_forward.1} parent=107 // pred_region
          _
        $region116: #{hkddnet_forward.1} parent=107 // pred_fallthru
          %v860 = vphi %v855, %v811
          %v861 = vphi %v856, %v812
        %vm862 = vsmask.f32 7424
        %v864 = vshrl.u32 %v860, 16
        %v866 = vshll.u32 %v860, 16
        %v868 = vrot.slane %v866, 1
        %v869 = vor.u32 %v864, %v868
        %v871 = vshll.u32 %v861, 16
        %v873 = vrot.slane %v871, 1
        %v874 = vsel %vm862, %v869, %v873
        %v875 = vshrl.u32 %v861, 16
        %v877 = vor.u32 %v875, %v873
        %878 = vrot.lane.b32.xlu0 %v874, 64
        %v879 = vpop.permute.xlu0 %878
        %880 = vrot.lane.b32.xlu0 %v877, 64
        %v881 = vpop.permute.xlu0 %880
        %vm884 = vcmask 1046528
        %v885 = vrot.slane %v860, 1
        %v886 = vrot.slane %v861, 1
        %v887 = vsel %vm884, %v885, %v886
        %vm888 = vcmask 523264
        %v890 = vsel %vm888, %v860, %v879
        %v893 = vsel %vm888, %v861, %v881
        %v895 = vld [vmem:[%s3] sm:$0xf]
        %v896 = vld [vmem:[%s3 + $0x4] sm:$0xf]
        %v897 = vld [vmem:[%s3 + $0x8] sm:$0xf]
        %v898 = vld [vmem:[%s3 + $0xc] sm:$0xf]
        %v899 = vld [vmem:[%s3 + $0x10] sm:$0xf]
        %v900 = vld [vmem:[%s3 + $0x14] sm:$0xf]
        %v901 = vld [vmem:[%s3 + $0x18] sm:$0xf]
        %v902 = vld [vmem:[%s3 + $0x1c] sm:$0xf]
        %v903 = vld [vmem:[%s3 + $0x20] sm:$0xf]
        %v904 = vld [vmem:[%s3 + $0x24] sm:$0xf]
        %v905 = vld [vmem:[%s3 + $0x28] sm:$0xf]
        %v906 = vld [vmem:[%s3 + $0x2c] sm:$0xf]
        %v907 = vld [vmem:[%s3 + $0x30] sm:$0xf]
        %v908 = vld [vmem:[%s3 + $0x34] sm:$0xf]
        %v909 = vld [vmem:[%s3 + $0x38] sm:$0xf]
        %v910 = vld [vmem:[%s3 + $0x3c] sm:$0xf]
        %v911 = vld [vmem:[%s3 + $0x40] sm:$0xf]
        %v912 = vld [vmem:[%s3 + $0x44] sm:$0xf]
        %v913 = vld [vmem:[%s3 + $0x48] sm:$0xf]
        %v914 = vld [vmem:[%s3 + $0x4c] sm:$0xf]
        %v915 = vld [vmem:[%s3 + $0x50] sm:$0xf]
        %v916 = vld [vmem:[%s3 + $0x54] sm:$0xf]
        %v917 = vld [vmem:[%s3 + $0x58] sm:$0xf]
        %v918 = vld [vmem:[%s3 + $0x5c] sm:$0xf]
        %v919 = vld [vmem:[%s4] sm:$0x1]
        %v921 = vlaneseq
        %v922 = vshrl.u32 %v921, 7
        %v923 = vsub.s32 0, %v922
        %v924 = vrot.slane %v919, %v923
        %v950 = vunpack.c.l.b16 %v895
        %v951 = vunpack.c.l.b16 %v896
        %v952 = vunpack.c.l.b16 %v897
        %v953 = vunpack.c.l.b16 %v898
        %v954 = vunpack.c.l.b16 %v899
        %v955 = vunpack.c.l.b16 %v900
        %v956 = vunpack.c.l.b16 %v901
        %v957 = vunpack.c.l.b16 %v902
        %v958 = vunpack.c.l.b16 %v903
        %v959 = vunpack.c.l.b16 %v904
        %v960 = vunpack.c.l.b16 %v905
        %v961 = vunpack.c.l.b16 %v906
        %v962 = vunpack.c.l.b16 %v907
        %v963 = vunpack.c.l.b16 %v908
        %v964 = vunpack.c.l.b16 %v909
        %v965 = vunpack.c.l.b16 %v910
        %v966 = vunpack.c.l.b16 %v911
        %v967 = vunpack.c.l.b16 %v912
        %v968 = vunpack.c.l.b16 %v913
        %v969 = vunpack.c.l.b16 %v914
        %v970 = vunpack.c.l.b16 %v915
        %v971 = vunpack.c.l.b16 %v916
        %v972 = vunpack.c.l.b16 %v917
        %v973 = vunpack.c.l.b16 %v918
        %v974 = vpack.c.b16 %v951, %v950
        %v975 = vpack.c.b16 %v953, %v952
        %v976 = vpack.c.b16 %v955, %v954
        %v977 = vpack.c.b16 %v957, %v956
        %v978 = vpack.c.b16 %v959, %v958
        %v979 = vpack.c.b16 %v961, %v960
        %v980 = vpack.c.b16 %v963, %v962
        %v981 = vpack.c.b16 %v965, %v964
        %v982 = vpack.c.b16 %v967, %v966
        %v983 = vpack.c.b16 %v969, %v968
        %v984 = vpack.c.b16 %v971, %v970
        %v985 = vpack.c.b16 %v973, %v972
        %v999 = vsel %vm888, %v887, 0
        %v1002 = vsel %vm888, %v886, 0
        %1004 = vmatprep.subr.bf16.mxu0 0
        %1005 = vmatpush1.bf16.msra.mxu0 %v974
        %1006 = vmatprep.subr.bf16.mxu0 0
        %1007 = vmatpush1.bf16.msra.mxu0 %v975
        %1008 = vmatprep.subr.bf16.mxu0 0
        %1009 = vmatpush1.bf16.msra.mxu0 %v976
        %1010 = vmatprep.subr.bf16.mxu0 0
        %1011 = vmatpush1.bf16.msra.mxu0 %v977
        %1012 = vmatprep.subr.bf16.mxu0 0
        %1013 = vmatpush1.bf16.msra.mxu0 %v978
        %1014 = vmatprep.subr.bf16.mxu0 0
        %1015 = vmatpush1.bf16.msra.mxu0 %v979
        %1016 = vmatprep.subr.bf16.mxu0 0
        %1017 = vmatpush1.bf16.msra.mxu0 %v980
        %1018 = vmatprep.subr.bf16.mxu0 0
        %1019 = vmatpush1.bf16.msra.mxu0 %v981
        %1020 = vmatprep.subr.bf16.mxu0 0
        %1021 = vmatpush1.bf16.msra.mxu0 %v982
        %1022 = vmatprep.subr.bf16.mxu0 0
        %1023 = vmatpush1.bf16.msra.mxu0 %v983
        %1024 = vmatprep.subr.bf16.mxu0 0
        %1025 = vmatpush1.bf16.msra.mxu0 %v984
        %1026 = vmatprep.subr.bf16.mxu0 0
        %1027 = vmatpush1.bf16.msra.mxu0 %v985
        %1028 = vmatprep.subr.bf16.mxu0 0
        %1029 = vmatpush1.bf16.msra.mxu0 0
        %1030 = vmatprep.subr.bf16.mxu0 0
        %1031 = vmatpush1.bf16.msra.mxu0 0
        %1032 = vmatprep.subr.bf16.mxu0 0
        %1033 = vmatpush1.bf16.msra.mxu0 0
        %1034 = vmatprep.subr.bf16.mxu0 0
        %1035 = vmatpush1.bf16.msra.mxu0 0
        %1036 = vmatprep.mubr.bf16.mxu0 %v999
        %1037 = vmatmul.mubr.bf16.gmra.mrb[0].mxu0 %v890
        %v1038 = vpop.f32.mrb[0].mxu0
        %v1039 = vadd.f32 %v924, %v1038
        %v1040 = vpop.f32.mrb[0].mxu0
        %v1041 = vpop.f32.mrb[0].mxu0
        %v1042 = vadd.f32 %v924, %v1041
        %v1043 = vpop.f32.mrb[0].mxu0
        %1044 = vmatprep.mubr.bf16.mxu0 %v1002
        %1045 = vmatmul.mubr.bf16.gmra.mrb[0].mxu0 %v893
        %v1046 = vpop.f32.mrb[0].mxu0
        %v1047 = vadd.f32 %v924, %v1046
        %v1048 = vpop.f32.mrb[0].mxu0
        %v1049 = vpop.f32.mrb[0].mxu0
        %v1050 = vpop.f32.mrb[0].mxu0
        %1051 = vdwg.mxu0
        %v1052 = vmax.f32 %v1039, 0.0
        %v1053 = vmax.f32 %v1042, 0.0
        %v1054 = vmax.f32 %v1047, 0.0
        %v1055 = vpack.c.bf16 %v1053, %v1052
        %v1056 = vpack.c.bf16 %v1054, %v1054
        %s1057 = ssub.s32 %s726, 1
        // Predicated region
        $region117: #{hkddnet_forward.1} parent=107 // pred_check
          %p1058 = pneg %p729
        $region118: #{hkddnet_forward.1} parent=107 // pred_check_branch
          %1060 = sbr.rel (%p1058) target = $region120
        $region119: #{hkddnet_forward.1} parent=107 // pred_region
          %v1061 = vlaneseq
          %v1062 = vshrl.u32 %v1061, 7
          %v1063 = vadd.s32 %v1062, 8
          %v1064 = vadd.s32 %v1062, 16
          %v1065 = vstv %s1057
          %v1066 = vadd.s32 %v1065, %v1062
          %v1067 = vadd.s32 %v1065, %v1063
          %v1068 = vadd.s32 %v1065, %v1064
          %vm1069 = vcmp.ge.s32.totalorder %v1066, 0
          %vm1070 = vcmp.ge.s32.totalorder %v1067, 0
          %vm1071 = vcmp.ge.s32.totalorder %v1068, 0
          %vm1072 = vcmp.lt.s32.totalorder %v1066, 16
          %vm1073 = vcmp.lt.s32.totalorder %v1067, 16
          %vm1074 = vcmp.lt.s32.totalorder %v1068, 16
          %vm1075 = vmand %vm1069, %vm1072
          %vm1076 = vmand %vm1070, %vm1073
          %vm1077 = vmand %vm1071, %vm1074
          %v1078 = vsel %vm1075, 1, 0
          %v1079 = vsel %vm1076, 1, 0
          %v1080 = vsel %vm1077, 1, 0
          %vm1081 = vcmp.eq.s32.totalorder %v1078, 1
          %vm1082 = vcmp.eq.s32.totalorder %v1079, 1
          %vm1083 = vcmp.eq.s32.totalorder %v1080, 1
          %vm1084 = vmpackc.low %vm1081, %vm1081
          %vm1085 = vmpackc.low %vm1082, %vm1082
          %vm1086 = vmpackc.low %vm1083, %vm1083
          %v1087 = vsel %vm1084, 65537, 0
          %v1088 = vsel %vm1085, 65537, 0
          %v1089 = vsel %vm1086, 65537, 0
          %v1090 = vunpack.c.l.b16 %v1087
          %v1091 = vunpack.c.l.b16 %v1088
          %v1092 = vunpack.c.l.b16 %v1089
          %v1093 = vpack.c.b16 %v1091, %v1090
          %v1094 = vpack.c.b16 %v1092, %v1092
          %vm1095 = vcmp.ne.s16.totalorder %v1093, 0
          %vm1096 = vcmp.ne.s16.totalorder %v1094, 0
          %v1097 = vsel %vm1095, %v1055, 0
          %v1098 = vsel %vm1096, %v1056, 0
        $region120: #{hkddnet_forward.1} parent=107 // pred_fallthru
          %v1099 = vphi 0, %v1097
          %v1100 = vphi 0, %v1098
        %p1101 = pneg %p729
        // Predicated region
        $region121: #{hkddnet_forward.1} parent=107 // pred_check
          _
        $region122: #{hkddnet_forward.1} parent=107 // pred_check_branch
          %1103 = sbr.rel (%p729) target = $region124
        $region123: #{hkddnet_forward.1} parent=107 // pred_region
          _
        $region124: #{hkddnet_forward.1} parent=107 // pred_fallthru
          %v1104 = vphi %v1099, %v1055
          %v1105 = vphi %v1100, %v1056
        %v1107 = vshrl.u32 %v1104, 16
        %v1109 = vshll.u32 %v1104, 16
        %v1111 = vrot.slane %v1109, 1
        %v1112 = vor.u32 %v1107, %v1111
        %v1114 = vshll.u32 %v1105, 16
        %v1116 = vrot.slane %v1114, 1
        %v1117 = vsel %vm862, %v1112, %v1116
        %v1121 = vrot.slane %v1104, 1
        %v1122 = vrot.slane %v1105, 1
        %v1123 = vsel %vm884, %v1121, %v1122
        %v1125 = vld [vmem:[%s5] sm:$0xff]
        %v1126 = vld [vmem:[%s5 + $0x8] sm:$0xff]
        %v1127 = vld [vmem:[%s5 + $0x10] sm:$0xff]
        %v1128 = vld [vmem:[%s5 + $0x18] sm:$0xff]
        %v1129 = vld [vmem:[%s5 + $0x20] sm:$0xff]
        %v1130 = vld [vmem:[%s5 + $0x28] sm:$0xff]
        %v1131 = vld [vmem:[%s5 + $0x30] sm:$0xff]
        %v1132 = vld [vmem:[%s5 + $0x38] sm:$0xff]
        %v1133 = vld [vmem:[%s5 + $0x40] sm:$0xff]
        %v1134 = vld [vmem:[%s5 + $0x48] sm:$0xff]
        %v1135 = vld [vmem:[%s5 + $0x50] sm:$0xff]
        %v1136 = vld [vmem:[%s5 + $0x58] sm:$0xff]
        %v1137 = vld [vmem:[%s5 + $0x60] sm:$0xff]
        %v1138 = vld [vmem:[%s5 + $0x68] sm:$0xff]
        %v1139 = vld [vmem:[%s5 + $0x70] sm:$0xff]
        %v1140 = vld [vmem:[%s5 + $0x78] sm:$0xff]
        %v1141 = vld [vmem:[%s5 + $0x80] sm:$0xff]
        %v1142 = vld [vmem:[%s5 + $0x88] sm:$0xff]
        %v1143 = vld [vmem:[%s5 + $0x90] sm:$0xff]
        %v1144 = vld [vmem:[%s5 + $0x98] sm:$0xff]
        %v1145 = vld [vmem:[%s5 + $0xa0] sm:$0xff]
        %v1146 = vld [vmem:[%s5 + $0xa8] sm:$0xff]
        %v1147 = vld [vmem:[%s5 + $0xb0] sm:$0xff]
        %v1148 = vld [vmem:[%s5 + $0xb8] sm:$0xff]
        %v1149 = vld [vmem:[%s5 + $0xc0] sm:$0xff]
        %v1150 = vld [vmem:[%s5 + $0xc8] sm:$0xff]
        %v1151 = vld [vmem:[%s5 + $0xd0] sm:$0xff]
        %v1152 = vld [vmem:[%s5 + $0xd8] sm:$0xff]
        %v1153 = vld [vmem:[%s5 + $0xe0] sm:$0xff]
        %v1154 = vld [vmem:[%s5 + $0xe8] sm:$0xff]
        %v1155 = vld [vmem:[%s5 + $0xf0] sm:$0xff]
        %v1156 = vld [vmem:[%s5 + $0xf8] sm:$0xff]
        %v1157 = vld [vmem:[%s5 + $0x100] sm:$0xff]
        %v1158 = vld [vmem:[%s5 + $0x108] sm:$0xff]
        %v1159 = vld [vmem:[%s5 + $0x110] sm:$0xff]
        %v1160 = vld [vmem:[%s5 + $0x118] sm:$0xff]
        %v1161 = vld [vmem:[%s5 + $0x120] sm:$0xff]
        %v1162 = vld [vmem:[%s5 + $0x128] sm:$0xff]
        %v1163 = vld [vmem:[%s5 + $0x130] sm:$0xff]
        %v1164 = vld [vmem:[%s5 + $0x138] sm:$0xff]
        %v1165 = vld [vmem:[%s5 + $0x140] sm:$0xff]
        %v1166 = vld [vmem:[%s5 + $0x148] sm:$0xff]
        %v1167 = vld [vmem:[%s5 + $0x150] sm:$0xff]
        %v1168 = vld [vmem:[%s5 + $0x158] sm:$0xff]
        %v1169 = vld [vmem:[%s5 + $0x160] sm:$0xff]
        %v1170 = vld [vmem:[%s5 + $0x168] sm:$0xff]
        %v1171 = vld [vmem:[%s5 + $0x170] sm:$0xff]
        %v1172 = vld [vmem:[%s5 + $0x178] sm:$0xff]
        %v1173 = vld [vmem:[%s6] sm:$0x3]
        %v1175 = vlaneseq
        %v1176 = vshrl.u32 %v1175, 7
        %v1177 = vsub.s32 0, %v1176
        %v1178 = vrot.slane %v1173, %v1177
        %v1179 = vlaneseq
        %v1180 = vshrl.u32 %v1179, 7
        %v1181 = vsub.s32 1, %v1180
        %v1182 = vrot.slane %v1173, %v1181
        %v1233 = vunpack.c.l.b16 %v1125
        %v1234 = vunpack.c.h.b16 %v1125
        %v1235 = vunpack.c.l.b16 %v1126
        %v1236 = vunpack.c.h.b16 %v1126
        %v1237 = vunpack.c.l.b16 %v1127
        %v1238 = vunpack.c.h.b16 %v1127
        %v1239 = vunpack.c.l.b16 %v1128
        %v1240 = vunpack.c.h.b16 %v1128
        %v1241 = vunpack.c.l.b16 %v1129
        %v1242 = vunpack.c.h.b16 %v1129
        %v1243 = vunpack.c.l.b16 %v1130
        %v1244 = vunpack.c.h.b16 %v1130
        %v1245 = vunpack.c.l.b16 %v1131
        %v1246 = vunpack.c.h.b16 %v1131
        %v1247 = vunpack.c.l.b16 %v1132
        %v1248 = vunpack.c.h.b16 %v1132
        %v1249 = vunpack.c.l.b16 %v1133
        %v1250 = vunpack.c.h.b16 %v1133
        %v1251 = vunpack.c.l.b16 %v1134
        %v1252 = vunpack.c.h.b16 %v1134
        %v1253 = vunpack.c.l.b16 %v1135
        %v1254 = vunpack.c.h.b16 %v1135
        %v1255 = vunpack.c.l.b16 %v1136
        %v1256 = vunpack.c.h.b16 %v1136
        %v1257 = vunpack.c.l.b16 %v1137
        %v1258 = vunpack.c.h.b16 %v1137
        %v1259 = vunpack.c.l.b16 %v1138
        %v1260 = vunpack.c.h.b16 %v1138
        %v1261 = vunpack.c.l.b16 %v1139
        %v1262 = vunpack.c.h.b16 %v1139
        %v1263 = vunpack.c.l.b16 %v1140
        %v1264 = vunpack.c.h.b16 %v1140
        %v1265 = vunpack.c.l.b16 %v1141
        %v1266 = vunpack.c.h.b16 %v1141
        %v1267 = vunpack.c.l.b16 %v1142
        %v1268 = vunpack.c.h.b16 %v1142
        %v1269 = vunpack.c.l.b16 %v1143
        %v1270 = vunpack.c.h.b16 %v1143
        %v1271 = vunpack.c.l.b16 %v1144
        %v1272 = vunpack.c.h.b16 %v1144
        %v1273 = vunpack.c.l.b16 %v1145
        %v1274 = vunpack.c.h.b16 %v1145
        %v1275 = vunpack.c.l.b16 %v1146
        %v1276 = vunpack.c.h.b16 %v1146
        %v1277 = vunpack.c.l.b16 %v1147
        %v1278 = vunpack.c.h.b16 %v1147
        %v1279 = vunpack.c.l.b16 %v1148
        %v1280 = vunpack.c.h.b16 %v1148
        %v1281 = vunpack.c.l.b16 %v1149
        %v1282 = vunpack.c.h.b16 %v1149
        %v1283 = vunpack.c.l.b16 %v1150
        %v1284 = vunpack.c.h.b16 %v1150
        %v1285 = vunpack.c.l.b16 %v1151
        %v1286 = vunpack.c.h.b16 %v1151
        %v1287 = vunpack.c.l.b16 %v1152
        %v1288 = vunpack.c.h.b16 %v1152
        %v1289 = vunpack.c.l.b16 %v1153
        %v1290 = vunpack.c.h.b16 %v1153
        %v1291 = vunpack.c.l.b16 %v1154
        %v1292 = vunpack.c.h.b16 %v1154
        %v1293 = vunpack.c.l.b16 %v1155
        %v1294 = vunpack.c.h.b16 %v1155
        %v1295 = vunpack.c.l.b16 %v1156
        %v1296 = vunpack.c.h.b16 %v1156
        %v1297 = vunpack.c.l.b16 %v1157
        %v1298 = vunpack.c.h.b16 %v1157
        %v1299 = vunpack.c.l.b16 %v1158
        %v1300 = vunpack.c.h.b16 %v1158
        %v1301 = vunpack.c.l.b16 %v1159
        %v1302 = vunpack.c.h.b16 %v1159
        %v1303 = vunpack.c.l.b16 %v1160
        %v1304 = vunpack.c.h.b16 %v1160
        %v1305 = vunpack.c.l.b16 %v1161
        %v1306 = vunpack.c.h.b16 %v1161
        %v1307 = vunpack.c.l.b16 %v1162
        %v1308 = vunpack.c.h.b16 %v1162
        %v1309 = vunpack.c.l.b16 %v1163
        %v1310 = vunpack.c.h.b16 %v1163
        %v1311 = vunpack.c.l.b16 %v1164
        %v1312 = vunpack.c.h.b16 %v1164
        %v1313 = vunpack.c.l.b16 %v1165
        %v1314 = vunpack.c.h.b16 %v1165
        %v1315 = vunpack.c.l.b16 %v1166
        %v1316 = vunpack.c.h.b16 %v1166
        %v1317 = vunpack.c.l.b16 %v1167
        %v1318 = vunpack.c.h.b16 %v1167
        %v1319 = vunpack.c.l.b16 %v1168
        %v1320 = vunpack.c.h.b16 %v1168
        %v1321 = vunpack.c.l.b16 %v1169
        %v1322 = vunpack.c.h.b16 %v1169
        %v1323 = vunpack.c.l.b16 %v1170
        %v1324 = vunpack.c.h.b16 %v1170
        %v1325 = vunpack.c.l.b16 %v1171
        %v1326 = vunpack.c.h.b16 %v1171
        %v1327 = vunpack.c.l.b16 %v1172
        %v1328 = vunpack.c.h.b16 %v1172
        %v1329 = vpack.c.b16 %v1235, %v1233
        %v1330 = vpack.c.b16 %v1236, %v1234
        %v1331 = vpack.c.b16 %v1239, %v1237
        %v1332 = vpack.c.b16 %v1240, %v1238
        %v1333 = vpack.c.b16 %v1243, %v1241
        %v1334 = vpack.c.b16 %v1244, %v1242
        %v1335 = vpack.c.b16 %v1247, %v1245
        %v1336 = vpack.c.b16 %v1248, %v1246
        %v1337 = vpack.c.b16 %v1251, %v1249
        %v1338 = vpack.c.b16 %v1252, %v1250
        %v1339 = vpack.c.b16 %v1255, %v1253
        %v1340 = vpack.c.b16 %v1256, %v1254
        %v1341 = vpack.c.b16 %v1259, %v1257
        %v1342 = vpack.c.b16 %v1260, %v1258
        %v1343 = vpack.c.b16 %v1263, %v1261
        %v1344 = vpack.c.b16 %v1264, %v1262
        %v1345 = vpack.c.b16 %v1267, %v1265
        %v1346 = vpack.c.b16 %v1268, %v1266
        %v1347 = vpack.c.b16 %v1271, %v1269
        %v1348 = vpack.c.b16 %v1272, %v1270
        %v1349 = vpack.c.b16 %v1275, %v1273
        %v1350 = vpack.c.b16 %v1276, %v1274
        %v1351 = vpack.c.b16 %v1279, %v1277
        %v1352 = vpack.c.b16 %v1280, %v1278
        %v1353 = vpack.c.b16 %v1283, %v1281
        %v1354 = vpack.c.b16 %v1284, %v1282
        %v1355 = vpack.c.b16 %v1287, %v1285
        %v1356 = vpack.c.b16 %v1288, %v1286
        %v1357 = vpack.c.b16 %v1291, %v1289
        %v1358 = vpack.c.b16 %v1292, %v1290
        %v1359 = vpack.c.b16 %v1295, %v1293
        %v1360 = vpack.c.b16 %v1296, %v1294
        %v1361 = vpack.c.b16 %v1299, %v1297
        %v1362 = vpack.c.b16 %v1300, %v1298
        %v1363 = vpack.c.b16 %v1303, %v1301
        %v1364 = vpack.c.b16 %v1304, %v1302
        %v1365 = vpack.c.b16 %v1307, %v1305
        %v1366 = vpack.c.b16 %v1308, %v1306
        %v1367 = vpack.c.b16 %v1311, %v1309
        %v1368 = vpack.c.b16 %v1312, %v1310
        %v1369 = vpack.c.b16 %v1315, %v1313
        %v1370 = vpack.c.b16 %v1316, %v1314
        %v1371 = vpack.c.b16 %v1319, %v1317
        %v1372 = vpack.c.b16 %v1320, %v1318
        %v1373 = vpack.c.b16 %v1323, %v1321
        %v1374 = vpack.c.b16 %v1324, %v1322
        %v1375 = vpack.c.b16 %v1327, %v1325
        %v1376 = vpack.c.b16 %v1328, %v1326
        %1425 = vmatprep.subr.bf16.mxu0 %v1330
        %1426 = vmatpush1.bf16.msra.mxu0 %v1329
        %1427 = vmatprep.subr.bf16.mxu0 %v1332
        %1428 = vmatpush1.bf16.msra.mxu0 %v1331
        %1429 = vmatprep.subr.bf16.mxu0 %v1334
        %1430 = vmatpush1.bf16.msra.mxu0 %v1333
        %1431 = vmatprep.subr.bf16.mxu0 %v1336
        %1432 = vmatpush1.bf16.msra.mxu0 %v1335
        %1433 = vmatprep.subr.bf16.mxu0 %v1338
        %1434 = vmatpush1.bf16.msra.mxu0 %v1337
        %1435 = vmatprep.subr.bf16.mxu0 %v1340
        %1436 = vmatpush1.bf16.msra.mxu0 %v1339
        %1437 = vmatprep.subr.bf16.mxu0 %v1342
        %1438 = vmatpush1.bf16.msra.mxu0 %v1341
        %1439 = vmatprep.subr.bf16.mxu0 %v1344
        %1440 = vmatpush1.bf16.msra.mxu0 %v1343
        %1441 = vmatprep.subr.bf16.mxu0 %v1346
        %1442 = vmatpush1.bf16.msra.mxu0 %v1345
        %1443 = vmatprep.subr.bf16.mxu0 %v1348
        %1444 = vmatpush1.bf16.msra.mxu0 %v1347
        %1445 = vmatprep.subr.bf16.mxu0 %v1350
        %1446 = vmatpush1.bf16.msra.mxu0 %v1349
        %1447 = vmatprep.subr.bf16.mxu0 %v1352
        %1448 = vmatpush1.bf16.msra.mxu0 %v1351
        %1449 = vmatprep.subr.bf16.mxu0 %v1354
        %1450 = vmatpush1.bf16.msra.mxu0 %v1353
        %1451 = vmatprep.subr.bf16.mxu0 %v1356
        %1452 = vmatpush1.bf16.msra.mxu0 %v1355
        %1453 = vmatprep.subr.bf16.mxu0 %v1358
        %1454 = vmatpush1.bf16.msra.mxu0 %v1357
        %1455 = vmatprep.subr.bf16.mxu0 %v1360
        %1456 = vmatpush1.bf16.msra.mxu0 %v1359
        %1457 = vmatprep.mubr.bf16.mxu0 %v1117
        %1458 = vmatmul.mubr.bf16.gmra.mrb[0].mxu0 %v1104
        %v1459 = vpop.f32.mrb[0].mxu0
        %v1460 = vadd.f32 %v1178, %v1459
        %v1461 = vpop.f32.mrb[0].mxu0
        %v1462 = vadd.f32 %v1182, %v1461
        %v1463 = vpop.f32.mrb[0].mxu0
        %v1464 = vadd.f32 %v1178, %v1463
        %v1465 = vpop.f32.mrb[0].mxu0
        %v1466 = vadd.f32 %v1182, %v1465
        %1467 = vdwg.mxu0
        %1468 = vmatprep.subr.bf16.mxu0 %v1362
        %1469 = vmatpush1.bf16.msra.mxu0 %v1361
        %1470 = vmatprep.subr.bf16.mxu0 %v1364
        %1471 = vmatpush1.bf16.msra.mxu0 %v1363
        %1472 = vmatprep.subr.bf16.mxu0 %v1366
        %1473 = vmatpush1.bf16.msra.mxu0 %v1365
        %1474 = vmatprep.subr.bf16.mxu0 %v1368
        %1475 = vmatpush1.bf16.msra.mxu0 %v1367
        %1476 = vmatprep.subr.bf16.mxu0 %v1370
        %1477 = vmatpush1.bf16.msra.mxu0 %v1369
        %1478 = vmatprep.subr.bf16.mxu0 %v1372
        %1479 = vmatpush1.bf16.msra.mxu0 %v1371
        %1480 = vmatprep.subr.bf16.mxu0 %v1374
        %1481 = vmatpush1.bf16.msra.mxu0 %v1373
        %1482 = vmatprep.subr.bf16.mxu0 %v1376
        %1483 = vmatpush1.bf16.msra.mxu0 %v1375
        %1484 = vmatprep.subr.bf16.mxu0 0
        %1485 = vmatpush1.bf16.msra.mxu0 0
        %1486 = vmatprep.subr.bf16.mxu0 0
        %1487 = vmatpush1.bf16.msra.mxu0 0
        %1488 = vmatprep.subr.bf16.mxu0 0
        %1489 = vmatpush1.bf16.msra.mxu0 0
        %1490 = vmatprep.subr.bf16.mxu0 0
        %1491 = vmatpush1.bf16.msra.mxu0 0
        %1492 = vmatprep.subr.bf16.mxu0 0
        %1493 = vmatpush1.bf16.msra.mxu0 0
        %1494 = vmatprep.subr.bf16.mxu0 0
        %1495 = vmatpush1.bf16.msra.mxu0 0
        %1496 = vmatprep.subr.bf16.mxu0 0
        %1497 = vmatpush1.bf16.msra.mxu0 0
        %1498 = vmatprep.subr.bf16.mxu0 0
        %1499 = vmatpush1.bf16.msra.mxu0 0
        %1500 = vmatprep.mubr.bf16.mxu0 0
        %1501 = vmatmul.mubr.bf16.gmra.mrb[0].mxu0 %v1123
        %v1502 = vpop.f32.mrb[0].mxu0
        %v1503 = vadd.f32 %v1460, %v1502
        %v1504 = vpop.f32.mrb[0].mxu0
        %v1505 = vadd.f32 %v1462, %v1504
        %v1506 = vpop.f32.mrb[0].mxu0
        %v1507 = vadd.f32 %v1464, %v1506
        %v1508 = vpop.f32.mrb[0].mxu0
        %v1509 = vadd.f32 %v1466, %v1508
        %1510 = vdwg.mxu0
        %v1511 = vmax.f32 %v1503, 0.0
        %v1512 = vmax.f32 %v1505, 0.0
        %v1513 = vmax.f32 %v1507, 0.0
        %v1514 = vmax.f32 %v1509, 0.0
        // Predicated region
        $region125: #{hkddnet_forward.1} parent=107 // pred_check
          %p1515 = pneg %p727
        $region126: #{hkddnet_forward.1} parent=107 // pred_check_branch
          %1517 = sbr.rel (%p1515) target = $region128
        $region127: #{hkddnet_forward.1} parent=107 // pred_region
          %v1518 = vlaneseq
          %vm1519 = vcmp.ge.s32.totalorder %v1518, 0
          %vm1520 = vcmp.lt.s32.totalorder %v1518, 256
          %vm1521 = vmand %vm1519, %vm1520
          %1522 = vst.msk [vmem:[#allocation2] sm:$0x3] %vm1521, 0.0
        $region128: #{hkddnet_forward.1} parent=107 // pred_fallthru
          _
        %v1523 = vld [vmem:[#allocation2] sm:$0x3]
        %v1524 = vadd.f32 %v1511, %v1513
        %v1525 = vrot.slane %v1524, 4
        %v1526 = vadd.f32 %v1524, %v1525
        %v1527 = vrot.slane %v1526, 2
        %v1528 = vadd.f32 %v1526, %v1527
        %v1529 = vrot.slane %v1528, 1
        %v1530 = vadd.f32 %v1528, %v1529
        %v1531 = vadd.f32 %v1512, %v1514
        %v1532 = vrot.slane %v1531, 4
        %v1533 = vadd.f32 %v1531, %v1532
        %v1534 = vrot.slane %v1533, 2
        %v1535 = vadd.f32 %v1533, %v1534
        %v1536 = vrot.slane %v1535, 1
        %v1537 = vadd.f32 %v1535, %v1536
        %v1540 = vcombine.low %v1530, %v1537
        %v1542 = vunpack.c.l.s4 1966171168
        %v1543 = vunpack.c.0.s8 %v1542
        %v1544 = vlaneseq
        %v1545 = vshrl.u32 %v1544, 7
        %v1546 = vsub.s32 %v1543, %v1545
        %v1547 = vrot.slane %v1540, %v1546
        %v1549 = vunpack.c.l.s4 1966171168
        %v1550 = vunpack.c.0.s8 %v1549
        %v1551 = vlaneseq
        %v1552 = vshrl.u32 %v1551, 7
        %v1553 = vsub.s32 %v1550, %v1552
        %v1554 = vrot.slane %v1547, %v1553
        %v1556 = vadd.f32 %v1523, %v1554
        %v1557 = vlaneseq
        %vm1558 = vcmp.ge.s32.totalorder %v1557, 0
        %vm1559 = vcmp.lt.s32.totalorder %v1557, 256
        %vm1560 = vmand %vm1558, %vm1559
        %1561 = vst.msk [vmem:[#allocation2] sm:$0x3] %vm1560, %v1556
        // Predicated region
        $region129: #{hkddnet_forward.1} parent=107 // pred_check
          %p1562 = pneg %p727
        $region130: #{hkddnet_forward.1} parent=107 // pred_check_branch
          %1564 = sbr.rel (%p1562) target = $region132
        $region131: #{hkddnet_forward.1} parent=107 // pred_region
          %v1565 = vld [vmem:[#allocation2] sm:$0x3]
          %v1566 = vmul.f32 %v1565, 0.0625
          %v1567 = vld [vmem:[%s722] sm:$0x1]
          %v1568 = vpack.c.bf16 %v1567, %v1567
          %v1569 = vld [vmem:[%s8] sm:$0xf]
          %v1570 = vld [vmem:[%s8 + $0x4] sm:$0xf]
          %v1571 = vld [vmem:[%s8 + $0x8] sm:$0xf]
          %v1572 = vld [vmem:[%s9] sm:$0x1]
          %v1576 = vunpack.c.l.b16 %v1569
          %v1577 = vunpack.c.l.b16 %v1570
          %v1578 = vunpack.c.l.b16 %v1571
          %v1579 = vpack.c.b16 %v1577, %v1576
          %v1580 = vpack.c.b16 %v1578, %v1578
          %vm1582 = vcmask 195584
          %v1584 = vsel %vm1582, %v1568, 0
          %vm1586 = vcmask 1043456
          %v1588 = vsel %vm1586, %v1580, 0
          %1590 = vmatprep.subr.bf16.mxu0 0
          %1591 = vmatpush1.bf16.msra.mxu0 %v1579
          %1592 = vmatprep.subr.bf16.mxu0 0
          %1593 = vmatpush1.bf16.msra.mxu0 %v1588
          %1594 = vmatprep.subr.bf16.mxu0 0
          %1595 = vmatpush1.bf16.msra.mxu0 0
          %1596 = vmatprep.subr.bf16.mxu0 0
          %1597 = vmatpush1.bf16.msra.mxu0 0
          %1598 = vmatprep.subr.bf16.mxu0 0
          %1599 = vmatpush1.bf16.msra.mxu0 0
          %1600 = vmatprep.subr.bf16.mxu0 0
          %1601 = vmatpush1.bf16.msra.mxu0 0
          %1602 = vmatprep.subr.bf16.mxu0 0
          %1603 = vmatpush1.bf16.msra.mxu0 0
          %1604 = vmatprep.subr.bf16.mxu0 0
          %1605 = vmatpush1.bf16.msra.mxu0 0
          %1606 = vmatprep.subr.bf16.mxu0 0
          %1607 = vmatpush1.bf16.msra.mxu0 0
          %1608 = vmatprep.subr.bf16.mxu0 0
          %1609 = vmatpush1.bf16.msra.mxu0 0
          %1610 = vmatprep.subr.bf16.mxu0 0
          %1611 = vmatpush1.bf16.msra.mxu0 0
          %1612 = vmatprep.subr.bf16.mxu0 0
          %1613 = vmatpush1.bf16.msra.mxu0 0
          %1614 = vmatprep.subr.bf16.mxu0 0
          %1615 = vmatpush1.bf16.msra.mxu0 0
          %1616 = vmatprep.subr.bf16.mxu0 0
          %1617 = vmatpush1.bf16.msra.mxu0 0
          %1618 = vmatprep.subr.bf16.mxu0 0
          %1619 = vmatpush1.bf16.msra.mxu0 0
          %1620 = vmatprep.subr.bf16.mxu0 0
          %1621 = vmatpush1.bf16.msra.mxu0 0
          %1622 = vmatprep.mubr.bf16.mxu0 0
          %1623 = vmatmul.mubr.bf16.gmra.mrb[0].mxu0 %v1584
          %v1624 = vpop.f32.mrb[0].mxu0
          %v1625 = vadd.f32 %v1572, %v1624
          %v1626 = vpop.f32.mrb[0].mxu0
          %v1627 = vpop.f32.mrb[0].mxu0
          %v1628 = vpop.f32.mrb[0].mxu0
          %1629 = vdwg.mxu0
          %v1630 = vmax.f32 %v1625, 0.0
          %v1631 = vpack.c.bf16 %v1630, %v1630
          %v1632 = vld [vmem:[%s10] sm:$0xf]
          %v1633 = vld [vmem:[%s10 + $0x4] sm:$0xf]
          %v1634 = vld [vmem:[%s10 + $0x8] sm:$0xf]
          %v1635 = vld [vmem:[%s10 + $0xc] sm:$0xf]
          %v1636 = vld [vmem:[%s10 + $0x10] sm:$0xf]
          %v1637 = vld [vmem:[%s10 + $0x14] sm:$0xf]
          %v1638 = vld [vmem:[%s10 + $0x18] sm:$0xf]
          %v1639 = vld [vmem:[%s10 + $0x1c] sm:$0xf]
          %v1640 = vld [vmem:[%s10 + $0x20] sm:$0xf]
          %v1641 = vld [vmem:[%s10 + $0x24] sm:$0xf]
          %v1642 = vld [vmem:[%s10 + $0x28] sm:$0xf]
          %v1643 = vld [vmem:[%s10 + $0x2c] sm:$0xf]
          %v1644 = vld [vmem:[%s10 + $0x30] sm:$0xf]
          %v1645 = vld [vmem:[%s10 + $0x34] sm:$0xf]
          %v1646 = vld [vmem:[%s10 + $0x38] sm:$0xf]
          %v1647 = vld [vmem:[%s10 + $0x3c] sm:$0xf]
          %v1648 = vld [vmem:[%s11] sm:$0x1]
          %v1665 = vunpack.c.l.b16 %v1632
          %v1666 = vunpack.c.l.b16 %v1633
          %v1667 = vunpack.c.l.b16 %v1634
          %v1668 = vunpack.c.l.b16 %v1635
          %v1669 = vunpack.c.l.b16 %v1636
          %v1670 = vunpack.c.l.b16 %v1637
          %v1671 = vunpack.c.l.b16 %v1638
          %v1672 = vunpack.c.l.b16 %v1639
          %v1673 = vunpack.c.l.b16 %v1640
          %v1674 = vunpack.c.l.b16 %v1641
          %v1675 = vunpack.c.l.b16 %v1642
          %v1676 = vunpack.c.l.b16 %v1643
          %v1677 = vunpack.c.l.b16 %v1644
          %v1678 = vunpack.c.l.b16 %v1645
          %v1679 = vunpack.c.l.b16 %v1646
          %v1680 = vunpack.c.l.b16 %v1647
          %v1681 = vpack.c.b16 %v1666, %v1665
          %v1682 = vpack.c.b16 %v1668, %v1667
          %v1683 = vpack.c.b16 %v1670, %v1669
          %v1684 = vpack.c.b16 %v1672, %v1671
          %v1685 = vpack.c.b16 %v1674, %v1673
          %v1686 = vpack.c.b16 %v1676, %v1675
          %v1687 = vpack.c.b16 %v1678, %v1677
          %v1688 = vpack.c.b16 %v1680, %v1679
          %1697 = vmatprep.subr.bf16.mxu0 0
          %1698 = vmatpush1.bf16.msra.mxu0 %v1681
          %1699 = vmatprep.subr.bf16.mxu0 0
          %1700 = vmatpush1.bf16.msra.mxu0 %v1682
          %1701 = vmatprep.subr.bf16.mxu0 0
          %1702 = vmatpush1.bf16.msra.mxu0 %v1683
          %1703 = vmatprep.subr.bf16.mxu0 0
          %1704 = vmatpush1.bf16.msra.mxu0 %v1684
          %1705 = vmatprep.subr.bf16.mxu0 0
          %1706 = vmatpush1.bf16.msra.mxu0 %v1685
          %1707 = vmatprep.subr.bf16.mxu0 0
          %1708 = vmatpush1.bf16.msra.mxu0 %v1686
          %1709 = vmatprep.subr.bf16.mxu0 0
          %1710 = vmatpush1.bf16.msra.mxu0 %v1687
          %1711 = vmatprep.subr.bf16.mxu0 0
          %1712 = vmatpush1.bf16.msra.mxu0 %v1688
          %1713 = vmatprep.subr.bf16.mxu0 0
          %1714 = vmatpush1.bf16.msra.mxu0 0
          %1715 = vmatprep.subr.bf16.mxu0 0
          %1716 = vmatpush1.bf16.msra.mxu0 0
          %1717 = vmatprep.subr.bf16.mxu0 0
          %1718 = vmatpush1.bf16.msra.mxu0 0
          %1719 = vmatprep.subr.bf16.mxu0 0
          %1720 = vmatpush1.bf16.msra.mxu0 0
          %1721 = vmatprep.subr.bf16.mxu0 0
          %1722 = vmatpush1.bf16.msra.mxu0 0
          %1723 = vmatprep.subr.bf16.mxu0 0
          %1724 = vmatpush1.bf16.msra.mxu0 0
          %1725 = vmatprep.subr.bf16.mxu0 0
          %1726 = vmatpush1.bf16.msra.mxu0 0
          %1727 = vmatprep.subr.bf16.mxu0 0
          %1728 = vmatpush1.bf16.msra.mxu0 0
          %1729 = vmatprep.mubr.bf16.mxu0 0
          %1730 = vmatmul.mubr.bf16.gmra.mrb[0].mxu0 %v1631
          %v1731 = vpop.f32.mrb[0].mxu0
          %v1732 = vadd.f32 %v1648, %v1731
          %v1733 = vpop.f32.mrb[0].mxu0
          %v1734 = vpop.f32.mrb[0].mxu0
          %v1735 = vpop.f32.mrb[0].mxu0
          %1736 = vdwg.mxu0
          %v1737 = vmax.f32 %v1732, 0.0
          %v1738 = vpack.c.bf16 %v1737, %v1737
          %v1739 = vld [vmem:[%s12] sm:$0xf]
          %v1740 = vld [vmem:[%s12 + $0x4] sm:$0xf]
          %v1741 = vld [vmem:[%s12 + $0x8] sm:$0xf]
          %v1742 = vld [vmem:[%s12 + $0xc] sm:$0xf]
          %v1743 = vld [vmem:[%s12 + $0x10] sm:$0xf]
          %v1744 = vld [vmem:[%s12 + $0x14] sm:$0xf]
          %v1745 = vld [vmem:[%s12 + $0x18] sm:$0xf]
          %v1746 = vld [vmem:[%s12 + $0x1c] sm:$0xf]
          %v1747 = vld [vmem:[%s13] sm:$0x1]
          %v1756 = vunpack.c.l.b16 %v1739
          %v1757 = vunpack.c.l.b16 %v1740
          %v1758 = vunpack.c.l.b16 %v1741
          %v1759 = vunpack.c.l.b16 %v1742
          %v1760 = vunpack.c.l.b16 %v1743
          %v1761 = vunpack.c.l.b16 %v1744
          %v1762 = vunpack.c.l.b16 %v1745
          %v1763 = vunpack.c.l.b16 %v1746
          %v1764 = vpack.c.b16 %v1757, %v1756
          %v1765 = vpack.c.b16 %v1759, %v1758
          %v1766 = vpack.c.b16 %v1761, %v1760
          %v1767 = vpack.c.b16 %v1763, %v1762
          %v1773 = vsel %vm888, %v1738, 0
          %1775 = vmatprep.subr.bf16.mxu0 0
          %1776 = vmatpush1.bf16.msra.mxu0 %v1764
          %1777 = vmatprep.subr.bf16.mxu0 0
          %1778 = vmatpush1.bf16.msra.mxu0 %v1765
          %1779 = vmatprep.subr.bf16.mxu0 0
          %1780 = vmatpush1.bf16.msra.mxu0 %v1766
          %1781 = vmatprep.subr.bf16.mxu0 0
          %1782 = vmatpush1.bf16.msra.mxu0 %v1767
          %1783 = vmatprep.subr.bf16.mxu0 0
          %1784 = vmatpush1.bf16.msra.mxu0 0
          %1785 = vmatprep.subr.bf16.mxu0 0
          %1786 = vmatpush1.bf16.msra.mxu0 0
          %1787 = vmatprep.subr.bf16.mxu0 0
          %1788 = vmatpush1.bf16.msra.mxu0 0
          %1789 = vmatprep.subr.bf16.mxu0 0
          %1790 = vmatpush1.bf16.msra.mxu0 0
          %1791 = vmatprep.subr.bf16.mxu0 0
          %1792 = vmatpush1.bf16.msra.mxu0 0
          %1793 = vmatprep.subr.bf16.mxu0 0
          %1794 = vmatpush1.bf16.msra.mxu0 0
          %1795 = vmatprep.subr.bf16.mxu0 0
          %1796 = vmatpush1.bf16.msra.mxu0 0
          %1797 = vmatprep.subr.bf16.mxu0 0
          %1798 = vmatpush1.bf16.msra.mxu0 0
          %1799 = vmatprep.subr.bf16.mxu0 0
          %1800 = vmatpush1.bf16.msra.mxu0 0
          %1801 = vmatprep.subr.bf16.mxu0 0
          %1802 = vmatpush1.bf16.msra.mxu0 0
          %1803 = vmatprep.subr.bf16.mxu0 0
          %1804 = vmatpush1.bf16.msra.mxu0 0
          %1805 = vmatprep.subr.bf16.mxu0 0
          %1806 = vmatpush1.bf16.msra.mxu0 0
          %1807 = vmatprep.mubr.bf16.mxu0 0
          %1808 = vmatmul.mubr.bf16.gmra.mrb[0].mxu0 %v1773
          %v1809 = vpop.f32.mrb[0].mxu0
          %v1810 = vadd.f32 %v1747, %v1809
          %v1811 = vpop.f32.mrb[0].mxu0
          %v1812 = vpop.f32.mrb[0].mxu0
          %v1813 = vpop.f32.mrb[0].mxu0
          %1814 = vdwg.mxu0
          %v1815 = vmax.f32 %v1810, 0.0
          %v1817 = vlaneseq
          %v1818 = vshrl.u32 %v1817, 7
          %v1819 = vsub.s32 0, %v1818
          %v1820 = vrot.slane %v1566, %v1819
          %v1821 = vlaneseq
          %v1822 = vshrl.u32 %v1821, 7
          %v1823 = vsub.s32 1, %v1822
          %v1824 = vrot.slane %v1566, %v1823
          %v1827 = vpack.c.bf16 %v1820, %v1820
          %v1828 = vpack.c.bf16 %v1824, %v1824
          %v1829 = vld [vmem:[%s14] sm:$0xff]
          %v1830 = vld [vmem:[%s14 + $0x8] sm:$0xf]
          %v1831 = vld [vmem:[%s14 + $0xc] sm:$0xff]
          %v1832 = vld [vmem:[%s14 + $0x14] sm:$0xf]
          %v1833 = vld [vmem:[%s14 + $0x18] sm:$0xff]
          %v1834 = vld [vmem:[%s14 + $0x20] sm:$0xf]
          %v1835 = vld [vmem:[%s14 + $0x24] sm:$0xff]
          %v1836 = vld [vmem:[%s14 + $0x2c] sm:$0xf]
          %v1837 = vld [vmem:[%s14 + $0x30] sm:$0xff]
          %v1838 = vld [vmem:[%s14 + $0x38] sm:$0xf]
          %v1839 = vld [vmem:[%s14 + $0x3c] sm:$0xff]
          %v1840 = vld [vmem:[%s14 + $0x44] sm:$0xf]
          %v1841 = vld [vmem:[%s14 + $0x48] sm:$0xff]
          %v1842 = vld [vmem:[%s14 + $0x50] sm:$0xf]
          %v1843 = vld [vmem:[%s14 + $0x54] sm:$0xff]
          %v1844 = vld [vmem:[%s14 + $0x5c] sm:$0xf]
          %v1845 = vld [vmem:[%s14 + $0x60] sm:$0xff]
          %v1846 = vld [vmem:[%s14 + $0x68] sm:$0xf]
          %v1847 = vld [vmem:[%s14 + $0x6c] sm:$0xff]
          %v1848 = vld [vmem:[%s14 + $0x74] sm:$0xf]
          %v1849 = vld [vmem:[%s14 + $0x78] sm:$0xff]
          %v1850 = vld [vmem:[%s14 + $0x80] sm:$0xf]
          %v1851 = vld [vmem:[%s14 + $0x84] sm:$0xff]
          %v1852 = vld [vmem:[%s14 + $0x8c] sm:$0xf]
          %v1853 = vld [vmem:[%s14 + $0x90] sm:$0xff]
          %v1854 = vld [vmem:[%s14 + $0x98] sm:$0xf]
          %v1855 = vld [vmem:[%s14 + $0x9c] sm:$0xff]
          %v1856 = vld [vmem:[%s14 + $0xa4] sm:$0xf]
          %v1857 = vld [vmem:[%s14 + $0xa8] sm:$0xff]
          %v1858 = vld [vmem:[%s14 + $0xb0] sm:$0xf]
          %v1859 = vld [vmem:[%s14 + $0xb4] sm:$0xff]
          %v1860 = vld [vmem:[%s14 + $0xbc] sm:$0xf]
          %v1861 = vld [vmem:[%s14 + $0xc0] sm:$0xff]
          %v1862 = vld [vmem:[%s14 + $0xc8] sm:$0xf]
          %v1863 = vld [vmem:[%s14 + $0xcc] sm:$0xff]
          %v1864 = vld [vmem:[%s14 + $0xd4] sm:$0xf]
          %v1865 = vld [vmem:[%s14 + $0xd8] sm:$0xff]
          %v1866 = vld [vmem:[%s14 + $0xe0] sm:$0xf]
          %v1867 = vld [vmem:[%s14 + $0xe4] sm:$0xff]
          %v1868 = vld [vmem:[%s14 + $0xec] sm:$0xf]
          %v1869 = vld [vmem:[%s14 + $0xf0] sm:$0xff]
          %v1870 = vld [vmem:[%s14 + $0xf8] sm:$0xf]
          %v1871 = vld [vmem:[%s14 + $0xfc] sm:$0xff]
          %v1872 = vld [vmem:[%s14 + $0x104] sm:$0xf]
          %v1873 = vld [vmem:[%s14 + $0x108] sm:$0xff]
          %v1874 = vld [vmem:[%s14 + $0x110] sm:$0xf]
          %v1875 = vld [vmem:[%s14 + $0x114] sm:$0xff]
          %v1876 = vld [vmem:[%s14 + $0x11c] sm:$0xf]
          %v1877 = vld [vmem:[%s14 + $0x120] sm:$0xff]
          %v1878 = vld [vmem:[%s14 + $0x128] sm:$0xf]
          %v1879 = vld [vmem:[%s14 + $0x12c] sm:$0xff]
          %v1880 = vld [vmem:[%s14 + $0x134] sm:$0xf]
          %v1881 = vld [vmem:[%s14 + $0x138] sm:$0xff]
          %v1882 = vld [vmem:[%s14 + $0x140] sm:$0xf]
          %v1883 = vld [vmem:[%s14 + $0x144] sm:$0xff]
          %v1884 = vld [vmem:[%s14 + $0x14c] sm:$0xf]
          %v1885 = vld [vmem:[%s14 + $0x150] sm:$0xff]
          %v1886 = vld [vmem:[%s14 + $0x158] sm:$0xf]
          %v1887 = vld [vmem:[%s14 + $0x15c] sm:$0xff]
          %v1888 = vld [vmem:[%s14 + $0x164] sm:$0xf]
          %v1889 = vld [vmem:[%s14 + $0x168] sm:$0xff]
          %v1890 = vld [vmem:[%s14 + $0x170] sm:$0xf]
          %v1891 = vld [vmem:[%s14 + $0x174] sm:$0xff]
          %v1892 = vld [vmem:[%s14 + $0x17c] sm:$0xf]
          %v1893 = vpack.c.bf16 %v1815, %v1815
          %v1894 = vld [vmem:[%s15] sm:$0xff]
          %v1895 = vld [vmem:[%s15 + $0x8] sm:$0xf]
          %v1896 = vld [vmem:[%s15 + $0xc] sm:$0xff]
          %v1897 = vld [vmem:[%s15 + $0x14] sm:$0xf]
          %v1898 = vld [vmem:[%s15 + $0x18] sm:$0xff]
          %v1899 = vld [vmem:[%s15 + $0x20] sm:$0xf]
          %v1900 = vld [vmem:[%s15 + $0x24] sm:$0xff]
          %v1901 = vld [vmem:[%s15 + $0x2c] sm:$0xf]
          %v1910 = vunpack.c.l.b16 %v1894
          %v1911 = vunpack.c.h.b16 %v1894
          %v1912 = vunpack.c.l.b16 %v1895
          %v1913 = vunpack.c.l.b16 %v1896
          %v1914 = vunpack.c.h.b16 %v1896
          %v1915 = vunpack.c.l.b16 %v1897
          %v1916 = vunpack.c.l.b16 %v1898
          %v1917 = vunpack.c.h.b16 %v1898
          %v1918 = vunpack.c.l.b16 %v1899
          %v1919 = vunpack.c.l.b16 %v1900
          %v1920 = vunpack.c.h.b16 %v1900
          %v1921 = vunpack.c.l.b16 %v1901
          %v1922 = vpack.c.b16 %v1913, %v1910
          %v1923 = vpack.c.b16 %v1914, %v1911
          %v1924 = vpack.c.b16 %v1915, %v1912
          %v1925 = vpack.c.b16 %v1919, %v1916
          %v1926 = vpack.c.b16 %v1920, %v1917
          %v1927 = vpack.c.b16 %v1921, %v1918
          %vm1934 = vcmask 261120
          %v1936 = vsel %vm1934, %v1893, 0
          %1938 = vmatprep.subr.bf16.mxu0 %v1923
          %1939 = vmatpush1.bf16.msra.mxu0 %v1922
          %1940 = vmatprep.subr.bf16.mxu0 %v1926
          %1941 = vmatpush1.bf16.msra.mxu0 %v1925
          %1942 = vmatprep.subr.bf16.mxu0 0
          %1943 = vmatpush1.bf16.msra.mxu0 0
          %1944 = vmatprep.subr.bf16.mxu0 0
          %1945 = vmatpush1.bf16.msra.mxu0 0
          %1946 = vmatprep.subr.bf16.mxu0 0
          %1947 = vmatpush1.bf16.msra.mxu0 0
          %1948 = vmatprep.subr.bf16.mxu0 0
          %1949 = vmatpush1.bf16.msra.mxu0 0
          %1950 = vmatprep.subr.bf16.mxu0 0
          %1951 = vmatpush1.bf16.msra.mxu0 0
          %1952 = vmatprep.subr.bf16.mxu0 0
          %1953 = vmatpush1.bf16.msra.mxu0 0
          %1954 = vmatprep.subr.bf16.mxu0 0
          %1955 = vmatpush1.bf16.msra.mxu0 0
          %1956 = vmatprep.subr.bf16.mxu0 0
          %1957 = vmatpush1.bf16.msra.mxu0 0
          %1958 = vmatprep.subr.bf16.mxu0 0
          %1959 = vmatpush1.bf16.msra.mxu0 0
          %1960 = vmatprep.subr.bf16.mxu0 0
          %1961 = vmatpush1.bf16.msra.mxu0 0
          %1962 = vmatprep.subr.bf16.mxu0 0
          %1963 = vmatpush1.bf16.msra.mxu0 0
          %1964 = vmatprep.subr.bf16.mxu0 0
          %1965 = vmatpush1.bf16.msra.mxu0 0
          %1966 = vmatprep.subr.bf16.mxu0 0
          %1967 = vmatpush1.bf16.msra.mxu0 0
          %1968 = vmatprep.subr.bf16.mxu0 0
          %1969 = vmatpush1.bf16.msra.mxu0 0
          %1970 = vmatprep.mubr.bf16.mxu0 0
          %1971 = vmatmul.mubr.bf16.gmra.mrb[0].mxu0 %v1936
          %v1972 = vpop.f32.mrb[0].mxu0
          %v1973 = vadd.f32 0.0, %v1972
          %v1974 = vpop.f32.mrb[0].mxu0
          %v1975 = vadd.f32 0.0, %v1974
          %v1976 = vpop.f32.mrb[0].mxu0
          %v1977 = vpop.f32.mrb[0].mxu0
          %1978 = vdwg.mxu0
          %1979 = vmatprep.subr.bf16.mxu0 0
          %1980 = vmatpush1.bf16.msra.mxu0 %v1924
          %1981 = vmatprep.subr.bf16.mxu0 0
          %1982 = vmatpush1.bf16.msra.mxu0 %v1927
          %1983 = vmatprep.subr.bf16.mxu0 0
          %1984 = vmatpush1.bf16.msra.mxu0 0
          %1985 = vmatprep.subr.bf16.mxu0 0
          %1986 = vmatpush1.bf16.msra.mxu0 0
          %1987 = vmatprep.subr.bf16.mxu0 0
          %1988 = vmatpush1.bf16.msra.mxu0 0
          %1989 = vmatprep.subr.bf16.mxu0 0
          %1990 = vmatpush1.bf16.msra.mxu0 0
          %1991 = vmatprep.subr.bf16.mxu0 0
          %1992 = vmatpush1.bf16.msra.mxu0 0
          %1993 = vmatprep.subr.bf16.mxu0 0
          %1994 = vmatpush1.bf16.msra.mxu0 0
          %1995 = vmatprep.subr.bf16.mxu0 0
          %1996 = vmatpush1.bf16.msra.mxu0 0
          %1997 = vmatprep.subr.bf16.mxu0 0
          %1998 = vmatpush1.bf16.msra.mxu0 0
          %1999 = vmatprep.subr.bf16.mxu0 0
          %2000 = vmatpush1.bf16.msra.mxu0 0
          %2001 = vmatprep.subr.bf16.mxu0 0
          %2002 = vmatpush1.bf16.msra.mxu0 0
          %2003 = vmatprep.subr.bf16.mxu0 0
          %2004 = vmatpush1.bf16.msra.mxu0 0
          %2005 = vmatprep.subr.bf16.mxu0 0
          %2006 = vmatpush1.bf16.msra.mxu0 0
          %2007 = vmatprep.subr.bf16.mxu0 0
          %2008 = vmatpush1.bf16.msra.mxu0 0
          %2009 = vmatprep.subr.bf16.mxu0 0
          %2010 = vmatpush1.bf16.msra.mxu0 0
          %2011 = vmatprep.mubr.bf16.mxu0 0
          %2012 = vmatmul.mubr.bf16.gmra.mrb[0].mxu0 %v1936
          %v2013 = vpop.f32.mrb[0].mxu0
          %v2014 = vadd.f32 0.0, %v2013
          %v2015 = vpop.f32.mrb[0].mxu0
          %v2016 = vpop.f32.mrb[0].mxu0
          %v2017 = vpop.f32.mrb[0].mxu0
          %2018 = vdwg.mxu0
          %v2083 = vunpack.c.l.b16 %v1829
          %v2084 = vunpack.c.h.b16 %v1829
          %v2085 = vunpack.c.l.b16 %v1830
          %v2086 = vunpack.c.l.b16 %v1831
          %v2087 = vunpack.c.h.b16 %v1831
          %v2088 = vunpack.c.l.b16 %v1832
          %v2089 = vunpack.c.l.b16 %v1833
          %v2090 = vunpack.c.h.b16 %v1833
          %v2091 = vunpack.c.l.b16 %v1834
          %v2092 = vunpack.c.l.b16 %v1835
          %v2093 = vunpack.c.h.b16 %v1835
          %v2094 = vunpack.c.l.b16 %v1836
          %v2095 = vunpack.c.l.b16 %v1837
          %v2096 = vunpack.c.h.b16 %v1837
          %v2097 = vunpack.c.l.b16 %v1838
          %v2098 = vunpack.c.l.b16 %v1839
          %v2099 = vunpack.c.h.b16 %v1839
          %v2100 = vunpack.c.l.b16 %v1840
          %v2101 = vunpack.c.l.b16 %v1841
          %v2102 = vunpack.c.h.b16 %v1841
          %v2103 = vunpack.c.l.b16 %v1842
          %v2104 = vunpack.c.l.b16 %v1843
          %v2105 = vunpack.c.h.b16 %v1843
          %v2106 = vunpack.c.l.b16 %v1844
          %v2107 = vunpack.c.l.b16 %v1845
          %v2108 = vunpack.c.h.b16 %v1845
          %v2109 = vunpack.c.l.b16 %v1846
          %v2110 = vunpack.c.l.b16 %v1847
          %v2111 = vunpack.c.h.b16 %v1847
          %v2112 = vunpack.c.l.b16 %v1848
          %v2113 = vunpack.c.l.b16 %v1849
          %v2114 = vunpack.c.h.b16 %v1849
          %v2115 = vunpack.c.l.b16 %v1850
          %v2116 = vunpack.c.l.b16 %v1851
          %v2117 = vunpack.c.h.b16 %v1851
          %v2118 = vunpack.c.l.b16 %v1852
          %v2119 = vunpack.c.l.b16 %v1853
          %v2120 = vunpack.c.h.b16 %v1853
          %v2121 = vunpack.c.l.b16 %v1854
          %v2122 = vunpack.c.l.b16 %v1855
          %v2123 = vunpack.c.h.b16 %v1855
          %v2124 = vunpack.c.l.b16 %v1856
          %v2125 = vunpack.c.l.b16 %v1857
          %v2126 = vunpack.c.h.b16 %v1857
          %v2127 = vunpack.c.l.b16 %v1858
          %v2128 = vunpack.c.l.b16 %v1859
          %v2129 = vunpack.c.h.b16 %v1859
          %v2130 = vunpack.c.l.b16 %v1860
          %v2131 = vunpack.c.l.b16 %v1861
          %v2132 = vunpack.c.h.b16 %v1861
          %v2133 = vunpack.c.l.b16 %v1862
          %v2134 = vunpack.c.l.b16 %v1863
          %v2135 = vunpack.c.h.b16 %v1863
          %v2136 = vunpack.c.l.b16 %v1864
          %v2137 = vunpack.c.l.b16 %v1865
          %v2138 = vunpack.c.h.b16 %v1865
          %v2139 = vunpack.c.l.b16 %v1866
          %v2140 = vunpack.c.l.b16 %v1867
          %v2141 = vunpack.c.h.b16 %v1867
          %v2142 = vunpack.c.l.b16 %v1868
          %v2143 = vunpack.c.l.b16 %v1869
          %v2144 = vunpack.c.h.b16 %v1869
          %v2145 = vunpack.c.l.b16 %v1870
          %v2146 = vunpack.c.l.b16 %v1871
          %v2147 = vunpack.c.h.b16 %v1871
          %v2148 = vunpack.c.l.b16 %v1872
          %v2149 = vunpack.c.l.b16 %v1873
          %v2150 = vunpack.c.h.b16 %v1873
          %v2151 = vunpack.c.l.b16 %v1874
          %v2152 = vunpack.c.l.b16 %v1875
          %v2153 = vunpack.c.h.b16 %v1875
          %v2154 = vunpack.c.l.b16 %v1876
          %v2155 = vunpack.c.l.b16 %v1877
          %v2156 = vunpack.c.h.b16 %v1877
          %v2157 = vunpack.c.l.b16 %v1878
          %v2158 = vunpack.c.l.b16 %v1879
          %v2159 = vunpack.c.h.b16 %v1879
          %v2160 = vunpack.c.l.b16 %v1880
          %v2161 = vunpack.c.l.b16 %v1881
          %v2162 = vunpack.c.h.b16 %v1881
          %v2163 = vunpack.c.l.b16 %v1882
          %v2164 = vunpack.c.l.b16 %v1883
          %v2165 = vunpack.c.h.b16 %v1883
          %v2166 = vunpack.c.l.b16 %v1884
          %v2167 = vunpack.c.l.b16 %v1885
          %v2168 = vunpack.c.h.b16 %v1885
          %v2169 = vunpack.c.l.b16 %v1886
          %v2170 = vunpack.c.l.b16 %v1887
          %v2171 = vunpack.c.h.b16 %v1887
          %v2172 = vunpack.c.l.b16 %v1888
          %v2173 = vunpack.c.l.b16 %v1889
          %v2174 = vunpack.c.h.b16 %v1889
          %v2175 = vunpack.c.l.b16 %v1890
          %v2176 = vunpack.c.l.b16 %v1891
          %v2177 = vunpack.c.h.b16 %v1891
          %v2178 = vunpack.c.l.b16 %v1892
          %v2179 = vpack.c.b16 %v2086, %v2083
          %v2180 = vpack.c.b16 %v2087, %v2084
          %v2181 = vpack.c.b16 %v2088, %v2085
          %v2182 = vpack.c.b16 %v2092, %v2089
          %v2183 = vpack.c.b16 %v2093, %v2090
          %v2184 = vpack.c.b16 %v2094, %v2091
          %v2185 = vpack.c.b16 %v2098, %v2095
          %v2186 = vpack.c.b16 %v2099, %v2096
          %v2187 = vpack.c.b16 %v2100, %v2097
          %v2188 = vpack.c.b16 %v2104, %v2101
          %v2189 = vpack.c.b16 %v2105, %v2102
          %v2190 = vpack.c.b16 %v2106, %v2103
          %v2191 = vpack.c.b16 %v2110, %v2107
          %v2192 = vpack.c.b16 %v2111, %v2108
          %v2193 = vpack.c.b16 %v2112, %v2109
          %v2194 = vpack.c.b16 %v2116, %v2113
          %v2195 = vpack.c.b16 %v2117, %v2114
          %v2196 = vpack.c.b16 %v2118, %v2115
          %v2197 = vpack.c.b16 %v2122, %v2119
          %v2198 = vpack.c.b16 %v2123, %v2120
          %v2199 = vpack.c.b16 %v2124, %v2121
          %v2200 = vpack.c.b16 %v2128, %v2125
          %v2201 = vpack.c.b16 %v2129, %v2126
          %v2202 = vpack.c.b16 %v2130, %v2127
          %v2203 = vpack.c.b16 %v2134, %v2131
          %v2204 = vpack.c.b16 %v2135, %v2132
          %v2205 = vpack.c.b16 %v2136, %v2133
          %v2206 = vpack.c.b16 %v2140, %v2137
          %v2207 = vpack.c.b16 %v2141, %v2138
          %v2208 = vpack.c.b16 %v2142, %v2139
          %v2209 = vpack.c.b16 %v2146, %v2143
          %v2210 = vpack.c.b16 %v2147, %v2144
          %v2211 = vpack.c.b16 %v2148, %v2145
          %v2212 = vpack.c.b16 %v2152, %v2149
          %v2213 = vpack.c.b16 %v2153, %v2150
          %v2214 = vpack.c.b16 %v2154, %v2151
          %v2215 = vpack.c.b16 %v2158, %v2155
          %v2216 = vpack.c.b16 %v2159, %v2156
          %v2217 = vpack.c.b16 %v2160, %v2157
          %v2218 = vpack.c.b16 %v2164, %v2161
          %v2219 = vpack.c.b16 %v2165, %v2162
          %v2220 = vpack.c.b16 %v2166, %v2163
          %v2221 = vpack.c.b16 %v2170, %v2167
          %v2222 = vpack.c.b16 %v2171, %v2168
          %v2223 = vpack.c.b16 %v2172, %v2169
          %v2224 = vpack.c.b16 %v2176, %v2173
          %v2225 = vpack.c.b16 %v2177, %v2174
          %v2226 = vpack.c.b16 %v2178, %v2175
          %2275 = vmatprep.subr.bf16.mxu0 %v2180
          %2276 = vmatpush1.bf16.msra.mxu0 %v2179
          %2277 = vmatprep.subr.bf16.mxu0 %v2183
          %2278 = vmatpush1.bf16.msra.mxu0 %v2182
          %2279 = vmatprep.subr.bf16.mxu0 %v2186
          %2280 = vmatpush1.bf16.msra.mxu0 %v2185
          %2281 = vmatprep.subr.bf16.mxu0 %v2189
          %2282 = vmatpush1.bf16.msra.mxu0 %v2188
          %2283 = vmatprep.subr.bf16.mxu0 %v2192
          %2284 = vmatpush1.bf16.msra.mxu0 %v2191
          %2285 = vmatprep.subr.bf16.mxu0 %v2195
          %2286 = vmatpush1.bf16.msra.mxu0 %v2194
          %2287 = vmatprep.subr.bf16.mxu0 %v2198
          %2288 = vmatpush1.bf16.msra.mxu0 %v2197
          %2289 = vmatprep.subr.bf16.mxu0 %v2201
          %2290 = vmatpush1.bf16.msra.mxu0 %v2200
          %2291 = vmatprep.subr.bf16.mxu0 %v2204
          %2292 = vmatpush1.bf16.msra.mxu0 %v2203
          %2293 = vmatprep.subr.bf16.mxu0 %v2207
          %2294 = vmatpush1.bf16.msra.mxu0 %v2206
          %2295 = vmatprep.subr.bf16.mxu0 %v2210
          %2296 = vmatpush1.bf16.msra.mxu0 %v2209
          %2297 = vmatprep.subr.bf16.mxu0 %v2213
          %2298 = vmatpush1.bf16.msra.mxu0 %v2212
          %2299 = vmatprep.subr.bf16.mxu0 %v2216
          %2300 = vmatpush1.bf16.msra.mxu0 %v2215
          %2301 = vmatprep.subr.bf16.mxu0 %v2219
          %2302 = vmatpush1.bf16.msra.mxu0 %v2218
          %2303 = vmatprep.subr.bf16.mxu0 %v2222
          %2304 = vmatpush1.bf16.msra.mxu0 %v2221
          %2305 = vmatprep.subr.bf16.mxu0 %v2225
          %2306 = vmatpush1.bf16.msra.mxu0 %v2224
          %2307 = vmatprep.mubr.bf16.mxu0 %v1828
          %2308 = vmatmul.mubr.bf16.gmra.mrb[0].mxu0 %v1827
          %v2309 = vpop.f32.mrb[0].mxu0
          %v2310 = vadd.f32 %v1973, %v2309
          %v2311 = vpop.f32.mrb[0].mxu0
          %v2312 = vadd.f32 %v1975, %v2311
          %v2313 = vpop.f32.mrb[0].mxu0
          %v2314 = vpop.f32.mrb[0].mxu0
          %2315 = vdwg.mxu0
          %2316 = vmatprep.subr.bf16.mxu0 0
          %2317 = vmatpush1.bf16.msra.mxu0 %v2181
          %2318 = vmatprep.subr.bf16.mxu0 0
          %2319 = vmatpush1.bf16.msra.mxu0 %v2184
          %2320 = vmatprep.subr.bf16.mxu0 0
          %2321 = vmatpush1.bf16.msra.mxu0 %v2187
          %2322 = vmatprep.subr.bf16.mxu0 0
          %2323 = vmatpush1.bf16.msra.mxu0 %v2190
          %2324 = vmatprep.subr.bf16.mxu0 0
          %2325 = vmatpush1.bf16.msra.mxu0 %v2193
          %2326 = vmatprep.subr.bf16.mxu0 0
          %2327 = vmatpush1.bf16.msra.mxu0 %v2196
          %2328 = vmatprep.subr.bf16.mxu0 0
          %2329 = vmatpush1.bf16.msra.mxu0 %v2199
          %2330 = vmatprep.subr.bf16.mxu0 0
          %2331 = vmatpush1.bf16.msra.mxu0 %v2202
          %2332 = vmatprep.subr.bf16.mxu0 0
          %2333 = vmatpush1.bf16.msra.mxu0 %v2205
          %2334 = vmatprep.subr.bf16.mxu0 0
          %2335 = vmatpush1.bf16.msra.mxu0 %v2208
          %2336 = vmatprep.subr.bf16.mxu0 0
          %2337 = vmatpush1.bf16.msra.mxu0 %v2211
          %2338 = vmatprep.subr.bf16.mxu0 0
          %2339 = vmatpush1.bf16.msra.mxu0 %v2214
          %2340 = vmatprep.subr.bf16.mxu0 0
          %2341 = vmatpush1.bf16.msra.mxu0 %v2217
          %2342 = vmatprep.subr.bf16.mxu0 0
          %2343 = vmatpush1.bf16.msra.mxu0 %v2220
          %2344 = vmatprep.subr.bf16.mxu0 0
          %2345 = vmatpush1.bf16.msra.mxu0 %v2223
          %2346 = vmatprep.subr.bf16.mxu0 0
          %2347 = vmatpush1.bf16.msra.mxu0 %v2226
          %2348 = vmatprep.mubr.bf16.mxu0 %v1828
          %2349 = vmatmul.mubr.bf16.gmra.mrb[0].mxu0 %v1827
          %v2350 = vpop.f32.mrb[0].mxu0
          %v2351 = vadd.f32 %v2014, %v2350
          %v2352 = vpop.f32.mrb[0].mxu0
          %v2353 = vpop.f32.mrb[0].mxu0
          %v2354 = vpop.f32.mrb[0].mxu0
          %2355 = vdwg.mxu0
          %v2356 = vld [vmem:[%s16] sm:$0x7]
          %v2358 = vlaneseq
          %v2359 = vshrl.u32 %v2358, 7
          %v2360 = vsub.s32 0, %v2359
          %v2361 = vrot.slane %v2356, %v2360
          %v2362 = vlaneseq
          %v2363 = vshrl.u32 %v2362, 7
          %v2364 = vsub.s32 1, %v2363
          %v2365 = vrot.slane %v2356, %v2364
          %v2366 = vlaneseq
          %v2367 = vshrl.u32 %v2366, 7
          %v2368 = vsub.s32 2, %v2367
          %v2369 = vrot.slane %v2356, %v2368
          %v2373 = vadd.f32 %v2310, %v2361
          %v2374 = vadd.f32 %v2312, %v2365
          %v2375 = vadd.f32 %v2351, %v2369
          %v2376 = vmax.f32 %v2373, 0.0
          %v2377 = vmax.f32 %v2374, 0.0
          %v2378 = vmax.f32 %v2375, 0.0
          %v2379 = vld [vmem:[%s17] sm:$0x7]
          %v2381 = vlaneseq
          %v2382 = vshrl.u32 %v2381, 7
          %v2383 = vsub.s32 0, %v2382
          %v2384 = vrot.slane %v2379, %v2383
          %v2385 = vlaneseq
          %v2386 = vshrl.u32 %v2385, 7
          %v2387 = vsub.s32 1, %v2386
          %v2388 = vrot.slane %v2379, %v2387
          %v2389 = vlaneseq
          %v2390 = vshrl.u32 %v2389, 7
          %v2391 = vsub.s32 2, %v2390
          %v2392 = vrot.slane %v2379, %v2391
          %v2396 = vmul.f32 %v2376, %v2384
          %v2397 = vmul.f32 %v2377, %v2388
          %v2398 = vmul.f32 %v2378, %v2392
          %vm2399 = vcmask 1040384
          %v2400 = vsel %vm2399, %v2396, 0.0
          %v2401 = vsel %vm2399, %v2397, 0.0
          %v2402 = vadd.f32 %v2400, %v2401
          %vm2403 = vcmask 253952
          %v2404 = vsel %vm2403, %v2398, 0.0
          %v2405 = vadd.f32 %v2402, %v2404
          %2406 = vadd.xlane.f32.xlu0 %v2405
          %v2407 = vpop.xlane.xlu0 %2406
          %v2408 = vld [vmem:[#allocation3] sm:$0x1]
          %v2409 = vadd.f32 %v2407, %v2408
          %v2410 = vxor.u32 %v2409, 2147483648
          %v2411 = vmul.f32 %v2410, 1.442695
          %v2412 = vpow.pop %v2411
          %v2413 = vadd.f32 %v2412, 1.0
          %v2414 = vrcp.pop %v2413
          %v2415 = vmul.f32 1.0, %v2414
          %2417 = vset.pattern.permute.xlu0 0
          %2418 = vperm.xlu0 %2417, %v2415
          %v2419 = vpop.permute.xlu0 %2418
          %v2420 = vlaneseq
          %v2421 = vshrl.u32 %v2420, 7
          %v2422 = vsub.s32 0, %v2421
          %v2423 = vrot.slane %v2419, %v2422
          %v2425 = vmul.f32 %v1566, %v2423
          %v2427 = vlaneseq
          %v2428 = vshrl.u32 %v2427, 7
          %v2429 = vsub.s32 0, %v2428
          %v2430 = vrot.slane %v2425, %v2429
          %v2431 = vlaneseq
          %v2432 = vshrl.u32 %v2431, 7
          %v2433 = vsub.s32 1, %v2432
          %v2434 = vrot.slane %v2425, %v2433
          %v2437 = vpack.c.bf16 %v2430, %v2430
          %v2438 = vpack.c.bf16 %v2434, %v2434
          %v2439 = vld [vmem:[%s19] sm:$0xf]
          %v2440 = vld [vmem:[%s19 + $0x4] sm:$0xf]
          %v2441 = vld [vmem:[%s19 + $0x8] sm:$0xf]
          %v2442 = vld [vmem:[%s19 + $0xc] sm:$0xf]
          %v2443 = vld [vmem:[%s19 + $0x10] sm:$0xf]
          %v2444 = vld [vmem:[%s19 + $0x14] sm:$0xf]
          %v2445 = vld [vmem:[%s19 + $0x18] sm:$0xf]
          %v2446 = vld [vmem:[%s19 + $0x1c] sm:$0xf]
          %v2447 = vld [vmem:[%s19 + $0x20] sm:$0xf]
          %v2448 = vld [vmem:[%s19 + $0x24] sm:$0xf]
          %v2449 = vld [vmem:[%s19 + $0x28] sm:$0xf]
          %v2450 = vld [vmem:[%s19 + $0x2c] sm:$0xf]
          %v2451 = vld [vmem:[%s19 + $0x30] sm:$0xf]
          %v2452 = vld [vmem:[%s19 + $0x34] sm:$0xf]
          %v2453 = vld [vmem:[%s19 + $0x38] sm:$0xf]
          %v2454 = vld [vmem:[%s19 + $0x3c] sm:$0xf]
          %v2455 = vld [vmem:[%s19 + $0x40] sm:$0xf]
          %v2456 = vld [vmem:[%s19 + $0x44] sm:$0xf]
          %v2457 = vld [vmem:[%s19 + $0x48] sm:$0xf]
          %v2458 = vld [vmem:[%s19 + $0x4c] sm:$0xf]
          %v2459 = vld [vmem:[%s19 + $0x50] sm:$0xf]
          %v2460 = vld [vmem:[%s19 + $0x54] sm:$0xf]
          %v2461 = vld [vmem:[%s19 + $0x58] sm:$0xf]
          %v2462 = vld [vmem:[%s19 + $0x5c] sm:$0xf]
          %v2463 = vld [vmem:[%s19 + $0x60] sm:$0xf]
          %v2464 = vld [vmem:[%s19 + $0x64] sm:$0xf]
          %v2465 = vld [vmem:[%s19 + $0x68] sm:$0xf]
          %v2466 = vld [vmem:[%s19 + $0x6c] sm:$0xf]
          %v2467 = vld [vmem:[%s19 + $0x70] sm:$0xf]
          %v2468 = vld [vmem:[%s19 + $0x74] sm:$0xf]
          %v2469 = vld [vmem:[%s19 + $0x78] sm:$0xf]
          %v2470 = vld [vmem:[%s19 + $0x7c] sm:$0xf]
          %v2472 = vmul.f32 %v1815, %v2419
          %v2473 = vpack.c.bf16 %v2472, %v2472
          %v2474 = vld [vmem:[%s20] sm:$0xf]
          %v2475 = vld [vmem:[%s20 + $0x4] sm:$0xf]
          %v2476 = vld [vmem:[%s20 + $0x8] sm:$0xf]
          %v2477 = vld [vmem:[%s20 + $0xc] sm:$0xf]
          %v2482 = vunpack.c.l.b16 %v2474
          %v2483 = vunpack.c.l.b16 %v2475
          %v2484 = vunpack.c.l.b16 %v2476
          %v2485 = vunpack.c.l.b16 %v2477
          %v2486 = vpack.c.b16 %v2483, %v2482
          %v2487 = vpack.c.b16 %v2485, %v2484
          %v2491 = vsel %vm1934, %v2473, 0
          %2493 = vmatprep.subr.bf16.mxu0 0
          %2494 = vmatpush1.bf16.msra.mxu0 %v2486
          %2495 = vmatprep.subr.bf16.mxu0 0
          %2496 = vmatpush1.bf16.msra.mxu0 %v2487
          %2497 = vmatprep.subr.bf16.mxu0 0
          %2498 = vmatpush1.bf16.msra.mxu0 0
          %2499 = vmatprep.subr.bf16.mxu0 0
          %2500 = vmatpush1.bf16.msra.mxu0 0
          %2501 = vmatprep.subr.bf16.mxu0 0
          %2502 = vmatpush1.bf16.msra.mxu0 0
          %2503 = vmatprep.subr.bf16.mxu0 0
          %2504 = vmatpush1.bf16.msra.mxu0 0
          %2505 = vmatprep.subr.bf16.mxu0 0
          %2506 = vmatpush1.bf16.msra.mxu0 0
          %2507 = vmatprep.subr.bf16.mxu0 0
          %2508 = vmatpush1.bf16.msra.mxu0 0
          %2509 = vmatprep.subr.bf16.mxu0 0
          %2510 = vmatpush1.bf16.msra.mxu0 0
          %2511 = vmatprep.subr.bf16.mxu0 0
          %2512 = vmatpush1.bf16.msra.mxu0 0
          %2513 = vmatprep.subr.bf16.mxu0 0
          %2514 = vmatpush1.bf16.msra.mxu0 0
          %2515 = vmatprep.subr.bf16.mxu0 0
          %2516 = vmatpush1.bf16.msra.mxu0 0
          %2517 = vmatprep.subr.bf16.mxu0 0
          %2518 = vmatpush1.bf16.msra.mxu0 0
          %2519 = vmatprep.subr.bf16.mxu0 0
          %2520 = vmatpush1.bf16.msra.mxu0 0
          %2521 = vmatprep.subr.bf16.mxu0 0
          %2522 = vmatpush1.bf16.msra.mxu0 0
          %2523 = vmatprep.subr.bf16.mxu0 0
          %2524 = vmatpush1.bf16.msra.mxu0 0
          %2525 = vmatprep.mubr.bf16.mxu0 0
          %2526 = vmatmul.mubr.bf16.gmra.mrb[0].mxu0 %v2491
          %v2527 = vpop.f32.mrb[0].mxu0
          %v2528 = vadd.f32 0.0, %v2527
          %v2529 = vpop.f32.mrb[0].mxu0
          %v2530 = vpop.f32.mrb[0].mxu0
          %v2531 = vpop.f32.mrb[0].mxu0
          %2532 = vdwg.mxu0
          %v2565 = vunpack.c.l.b16 %v2439
          %v2566 = vunpack.c.l.b16 %v2440
          %v2567 = vunpack.c.l.b16 %v2441
          %v2568 = vunpack.c.l.b16 %v2442
          %v2569 = vunpack.c.l.b16 %v2443
          %v2570 = vunpack.c.l.b16 %v2444
          %v2571 = vunpack.c.l.b16 %v2445
          %v2572 = vunpack.c.l.b16 %v2446
          %v2573 = vunpack.c.l.b16 %v2447
          %v2574 = vunpack.c.l.b16 %v2448
          %v2575 = vunpack.c.l.b16 %v2449
          %v2576 = vunpack.c.l.b16 %v2450
          %v2577 = vunpack.c.l.b16 %v2451
          %v2578 = vunpack.c.l.b16 %v2452
          %v2579 = vunpack.c.l.b16 %v2453
          %v2580 = vunpack.c.l.b16 %v2454
          %v2581 = vunpack.c.l.b16 %v2455
          %v2582 = vunpack.c.l.b16 %v2456
          %v2583 = vunpack.c.l.b16 %v2457
          %v2584 = vunpack.c.l.b16 %v2458
          %v2585 = vunpack.c.l.b16 %v2459
          %v2586 = vunpack.c.l.b16 %v2460
          %v2587 = vunpack.c.l.b16 %v2461
          %v2588 = vunpack.c.l.b16 %v2462
          %v2589 = vunpack.c.l.b16 %v2463
          %v2590 = vunpack.c.l.b16 %v2464
          %v2591 = vunpack.c.l.b16 %v2465
          %v2592 = vunpack.c.l.b16 %v2466
          %v2593 = vunpack.c.l.b16 %v2467
          %v2594 = vunpack.c.l.b16 %v2468
          %v2595 = vunpack.c.l.b16 %v2469
          %v2596 = vunpack.c.l.b16 %v2470
          %v2597 = vpack.c.b16 %v2566, %v2565
          %v2598 = vpack.c.b16 %v2568, %v2567
          %v2599 = vpack.c.b16 %v2570, %v2569
          %v2600 = vpack.c.b16 %v2572, %v2571
          %v2601 = vpack.c.b16 %v2574, %v2573
          %v2602 = vpack.c.b16 %v2576, %v2575
          %v2603 = vpack.c.b16 %v2578, %v2577
          %v2604 = vpack.c.b16 %v2580, %v2579
          %v2605 = vpack.c.b16 %v2582, %v2581
          %v2606 = vpack.c.b16 %v2584, %v2583
          %v2607 = vpack.c.b16 %v2586, %v2585
          %v2608 = vpack.c.b16 %v2588, %v2587
          %v2609 = vpack.c.b16 %v2590, %v2589
          %v2610 = vpack.c.b16 %v2592, %v2591
          %v2611 = vpack.c.b16 %v2594, %v2593
          %v2612 = vpack.c.b16 %v2596, %v2595
          %2629 = vmatprep.subr.bf16.mxu0 0
          %2630 = vmatpush1.bf16.msra.mxu0 %v2597
          %2631 = vmatprep.subr.bf16.mxu0 0
          %2632 = vmatpush1.bf16.msra.mxu0 %v2598
          %2633 = vmatprep.subr.bf16.mxu0 0
          %2634 = vmatpush1.bf16.msra.mxu0 %v2599
          %2635 = vmatprep.subr.bf16.mxu0 0
          %2636 = vmatpush1.bf16.msra.mxu0 %v2600
          %2637 = vmatprep.subr.bf16.mxu0 0
          %2638 = vmatpush1.bf16.msra.mxu0 %v2601
          %2639 = vmatprep.subr.bf16.mxu0 0
          %2640 = vmatpush1.bf16.msra.mxu0 %v2602
          %2641 = vmatprep.subr.bf16.mxu0 0
          %2642 = vmatpush1.bf16.msra.mxu0 %v2603
          %2643 = vmatprep.subr.bf16.mxu0 0
          %2644 = vmatpush1.bf16.msra.mxu0 %v2604
          %2645 = vmatprep.subr.bf16.mxu0 0
          %2646 = vmatpush1.bf16.msra.mxu0 %v2605
          %2647 = vmatprep.subr.bf16.mxu0 0
          %2648 = vmatpush1.bf16.msra.mxu0 %v2606
          %2649 = vmatprep.subr.bf16.mxu0 0
          %2650 = vmatpush1.bf16.msra.mxu0 %v2607
          %2651 = vmatprep.subr.bf16.mxu0 0
          %2652 = vmatpush1.bf16.msra.mxu0 %v2608
          %2653 = vmatprep.subr.bf16.mxu0 0
          %2654 = vmatpush1.bf16.msra.mxu0 %v2609
          %2655 = vmatprep.subr.bf16.mxu0 0
          %2656 = vmatpush1.bf16.msra.mxu0 %v2610
          %2657 = vmatprep.subr.bf16.mxu0 0
          %2658 = vmatpush1.bf16.msra.mxu0 %v2611
          %2659 = vmatprep.subr.bf16.mxu0 0
          %2660 = vmatpush1.bf16.msra.mxu0 %v2612
          %2661 = vmatprep.mubr.bf16.mxu0 %v2438
          %2662 = vmatmul.mubr.bf16.gmra.mrb[0].mxu0 %v2437
          %v2663 = vpop.f32.mrb[0].mxu0
          %v2664 = vadd.f32 %v2528, %v2663
          %v2665 = vpop.f32.mrb[0].mxu0
          %v2666 = vpop.f32.mrb[0].mxu0
          %v2667 = vpop.f32.mrb[0].mxu0
          %2668 = vdwg.mxu0
          %v2669 = vld [vmem:[%s21] sm:$0x1]
          %v2670 = vadd.f32 %v2664, %v2669
          %vm2671 = vcmask 73728
          %v2672 = vsel %vm2671, %v2670, -inf
          %2673 = vmax.xlane.f32.xlu0 %v2672
          %v2674 = vpop.xlane.xlu0 %2673
          %v2675 = vsub.f32 %v2670, %v2674
          %v2676 = vmul.f32 %v2675, 1.442695
          %v2677 = vpow.pop %v2676
          %v2678 = vsel %vm2671, %v2677, 0.0
          %2679 = vadd.xlane.f32.xlu0 %v2678
          %v2680 = vpop.xlane.xlu0 %2679
          %v2681 = vlog2.pop %v2680
          %v2682 = vmul.f32 %v2681, 0.6931472
          %v2683 = vsub.f32 %v2675, %v2682
          %2684 = vst.msk [vmem:[%s710] sm:$0x1] %vm2671, %v2683
        $region132: #{hkddnet_forward.1} parent=107 // pred_fallthru
          _
        %s2685 = sand.u32 %s532, 1
        %s2686 = scalar_lea.sflag [#allocation5], %s2685
        %s2687 = sand.u32 %s532, 1
        %s2688 = scalar_lea.vmem [#allocation4], %s2687
        // Predicated region
        $region133: #{hkddnet_forward.1} parent=107 // pred_check
          %p2689 = pneg %p542
        $region134: #{hkddnet_forward.1} parent=107 // pred_check_branch
          %2691 = sbr.rel (%p2689) target = $region136
        $region135: #{hkddnet_forward.1} parent=107 // pred_region
          %s2693 = ssub.s32 16, 16
          %2694 = vsyncadd %s2686, %s2693
          %s2695 = smul.addr %s42, 16
          %s2696 = scalar_lea.hbm %s22, %s2695
          %s2698 = sshll.u32 %s2688, 4
          %s2699 = int_to_ptr.vmem [resolvable:$true] %s2698
          %2701 = dma.vmem_to_hbm [thread:$0]  %s2699, 16, %s2696, %s2686
        $region136: #{hkddnet_forward.1} parent=107 // pred_fallthru
          _
      $region108: #{hkddnet_forward.1} parent=5 // pred_fallthru
        _
      %p2702 = scmp.le.s32.totalorder 2, %s33
      // Predicated region
      $region137: #{hkddnet_forward.1} parent=5 // pred_check
        %p2703 = pneg %p2702
      $region138: #{hkddnet_forward.1} parent=5 // pred_check_branch
        %2705 = sbr.rel (%p2703) target = $region140
      $region139: #{hkddnet_forward.1} parent=5 // pred_region
        %s2706 = ssub.s32 %s33, 2
        // Predicated region
        $region141: #{hkddnet_forward.1} parent=139 // pred_check
          %p2707 = pneg %p548
        $region142: #{hkddnet_forward.1} parent=139 // pred_check_branch
          %2709 = sbr.rel (%p2707) target = $region144
        $region143: #{hkddnet_forward.1} parent=139 // pred_region
          %s2710 = sand.u32 %s533, 1
          %s2711 = scalar_lea.sflag [#allocation5], %s2710
          %s2712 = sand.u32 %s533, 1
          %s2713 = scalar_lea.vmem [#allocation4], %s2712
          %2714 = dma.done %s2711, 16
        $region144: #{hkddnet_forward.1} parent=139 // pred_fallthru
          _
      $region140: #{hkddnet_forward.1} parent=5 // pred_fallthru
        _
    $region6: #{hkddnet_forward.1} parent=1 // loop_footer
      %s37 = sadd.s32 1, %s33
    $region7: #{hkddnet_forward.1} parent=1 // loop_footer_branch
      %32 = sbr.rel target = $region3
    $region8: #{hkddnet_forward.1} parent=1 // loop_exit
      _
    %2715 = vsyncpa [#allocation5], 1
    %s2716 = scalar_lea.sflag [#allocation5], 1
    %2717 = vsyncpa %s2716, 1

</llo_original>
